<compile_context>
chip_gen: v6e
topology: v6e:2x2x1
jax: 0.10.0
libtpu: 0.0.40
codegen_flags: <defaults>
</compile_context>

<pallas_src>
import math

import jax
import jax.numpy as jnp
from jax.experimental import pallas as pl
from jax.experimental.pallas import tpu as pltpu

_MiB = 1024 * 1024


def _inter_contact_kernel(s_ref, sj_ref, z_ref, wi_ref, wz_ref, o_ref):
    # s_ref : (1, TILE_I, c_s)            s rows of this i-tile
    # sj_ref: (1, 1, 1, TILE_J*c_out)     s@W_j + bias for this j-tile (one row)
    # z_ref : (1, TILE_I, TILE_J*c_z)     pair tile; lanes run over (j_local, c)
    # wi_ref: (c_s, TILE_J*c_out)         W_i replicated TILE_J times along lanes
    # wz_ref: (TILE_J*c_z, TILE_J*c_out)  block-diagonal expansion of W_z
    # o_ref : (1, TILE_I, TILE_J*c_out)   lane-dense output tile
    z_tile = z_ref[0]
    if z_tile.dtype != wz_ref.dtype:
        # Optional reduced-precision MXU path (e.g. bf16 on v5e for f32 inputs);
        # HBM traffic stays in the native dtype, accumulation stays f32.
        z_tile = z_tile.astype(wz_ref.dtype)
    acc = jnp.dot(z_tile, wz_ref[...], preferred_element_type=jnp.float32)
    acc = acc + jnp.dot(s_ref[0], wi_ref[...], preferred_element_type=jnp.float32)
    acc = acc + sj_ref[0, 0].astype(jnp.float32)   # (1, TJ*c_out) bcast over i rows
    o_ref[0] = acc.astype(o_ref.dtype)


def _vmem_capacity_bytes():
    try:
        return int(pltpu.get_tpu_info().vmem_capacity_bytes)
    except Exception:
        return 64 * _MiB   # conservative: v7x per-TensorCore


def _pipeline_mode_supported():
    try:
        pl.BlockSpec((8, 128), lambda i: (0, 0), pipeline_mode=pl.Buffered(1))
        return True
    except Exception:
        return False


def _spec(shape, index_map, buffers=None, supported=True):
    if buffers is None or not supported:
        return pl.BlockSpec(shape, index_map)
    return pl.BlockSpec(shape, index_map, pipeline_mode=pl.Buffered(buffers))


def _sublane_align(*dtypes):
    return max({4: 8, 2: 16, 1: 32}.get(jnp.dtype(d).itemsize, 8) for d in dtypes)


def _pick_tile_j(n, c_z, c_out):
    """Smallest j-tile keeping both the z block (TILE_J*c_z lanes) and the
    output block (TILE_J*c_out lanes) lane-dense (multiples of 128).  For small
    N we fall back to whole-row blocks (block dim == full dim is always legal).
    Returns (tile_j, n_padded)."""
    lm_out = 128 // math.gcd(128, c_out)
    lm_z = 128 // math.gcd(128, c_z)
    tj = lm_out * lm_z // math.gcd(lm_out, lm_z)   # lcm
    if tj >= n:
        return n, n
    n_pad = ((n + tj - 1) // tj) * tj
    return tj, n_pad


def _pick_tile_i(n, align, per_row_bytes, budget_bytes, cap=256):
    """Largest divisor of n (sublane-aligned, or n itself, capped at 256) whose
    double-buffered z+out blocks fit the VMEM budget; falls back to the
    smallest legal tile when nothing fits (graceful degradation)."""
    valid = [t for t in range(1, min(n, cap) + 1)
             if n % t == 0 and (t % align == 0 or t == n)]
    if not valid:
        return n
    fitting = [t for t in valid if 2 * t * per_row_bytes <= budget_bytes]
    return max(fitting) if fitting else min(valid)


def inter_contact_head(s, z, w, bias, *, tile_i=None, z_matmul_dtype=None):
    """s: (B, N, c_s), z: (B, N, N, c_z), w: (2*c_s + c_z, c_out), bias: (c_out,)

    z_matmul_dtype: optional dtype for the z @ W_z MXU pass (e.g. jnp.bfloat16 on
    v5e for f32 activations, where f32-via-MXU cannot keep up with the
    block-diagonal flop inflation). Accumulation is always f32.
    """
    B, N, c_s = s.shape
    assert z.shape[:3] == (B, N, N)
    c_z = z.shape[-1]
    c_out = w.shape[-1]
    assert w.shape[0] == 2 * c_s + c_z

    out_dtype = s.dtype
    z_mm_dtype = jnp.dtype(z_matmul_dtype) if z_matmul_dtype is not None \
        else jnp.dtype(z.dtype)
    # TODO(synk): if activations are bf16 the Linear weights are cast to bf16
    # before the MXU (f32 accumulation); results diverge slightly from an f32
    # PyTorch Linear.

    # --- split the concat-space Linear weight (cheap, plain JAX) ---
    w_i = w[:c_s]                    # (c_s, c_out)   -> pairs with s_i
    w_j = w[c_s:2 * c_s]             # (c_s, c_out)   -> pairs with s_j
    w_z = w[2 * c_s:]                # (c_z, c_out)   -> pairs with z

    # --- j tiling (lane axis) + pad the j axis if N % tile_j != 0 ---
    tile_j, n_pad = _pick_tile_j(N, c_z, c_out)
    if n_pad != N:
        z = jnp.pad(z, ((0, 0), (0, 0), (0, n_pad - N), (0, 0)))

    # --- generation-aware VMEM budgeting ---
    vmem_cap = _vmem_capacity_bytes()
    small_vmem = vmem_cap <= 96 * _MiB          # v7x: 64 MiB per TensorCore
    io_budget = (18 if small_vmem else 56) * _MiB
    limit_ceiling = (40 if small_vmem else 88) * _MiB

    z_item = jnp.dtype(z.dtype).itemsize
    s_item = jnp.dtype(s.dtype).itemsize
    out_item = jnp.dtype(out_dtype).itemsize
    align = _sublane_align(z.dtype, out_dtype)
    per_row_bytes = tile_j * (c_z * z_item + c_out * out_item)
    if tile_i is None:
        tile_i = _pick_tile_i(N, align, per_row_bytes, budget_bytes=io_budget)
    assert N % tile_i == 0, "tile_i must divide N"
    assert tile_i % align == 0 or tile_i == N, "tile_i must be sublane-aligned"

    # --- s_j projection (+ bias folded in): tiny (B*N*c_out), done once outside ---
    sj_proj = jnp.dot(s.astype(jnp.float32), w_j.astype(jnp.float32)) \
        + bias.astype(jnp.float32)                                   # (B, N, c_out)
    if n_pad != N:
        sj_proj = jnp.pad(sj_proj, ((0, 0), (0, n_pad - N), (0, 0)))
    # One lane-dense row per j-tile; no sublane replication (kernel reads row 0).
    sj_rows = sj_proj.reshape(B, n_pad // tile_j, 1, tile_j * c_out)

    # --- lane-expanded weights (built once, tiny vs. z traffic) ---
    # wz_exp[jl*c_z + c, jl*c_out + o] = w_z[c, o]   (block diagonal)
    wz_exp = jnp.kron(jnp.eye(tile_j, dtype=w_z.dtype), w_z).astype(z_mm_dtype)
    # wi_tiled[k, jl*c_out + o] = w_i[k, o]
    wi_tiled = jnp.tile(w_i, (1, tile_j)).astype(s.dtype)

    # z with (j, c) merged onto the lane axis — a free row-major reshape.
    z_flat = z.reshape(B, N, n_pad * c_z)

    grid = (B, N // tile_i, n_pad // tile_j)
    n_steps = B * (N // tile_i) * (n_pad // tile_j)

    # Actually-executed MXU flops (block-diag W_z inflates the logical
    # concat-Linear count by ~tile_j x), so XLA schedules around us honestly.
    flops = n_steps * 2 * tile_i * tile_j * c_out * (tile_j * c_z + c_s)
    bytes_accessed = (z_flat.size * z_item
                      + s.size * s_item
                      + sj_rows.size * 4
                      + wz_exp.size * jnp.dtype(z_mm_dtype).itemsize
                      + wi_tiled.size * s_item
                      + B * N * n_pad * c_out * out_item)

    # --- buffering & VMEM accounting ---
    pm_ok = _pipeline_mode_supported()
    z_tile_bytes = tile_i * tile_j * c_z * z_item
    # Deeper z buffering only on large-VMEM chips and only for small tiles.
    z_buffers = 3 if (pm_ok and not small_vmem and z_tile_bytes < 2 * _MiB) else None
    weight_bufs = 1 if pm_ok else 2
    vmem_est = ((z_buffers or 2) * z_tile_bytes
                + 2 * tile_i * tile_j * c_out * out_item
                + 2 * tile_i * c_s * s_item
                + 2 * tile_j * c_out * 4
                + weight_bufs * (wz_exp.size * jnp.dtype(z_mm_dtype).itemsize
                                 + wi_tiled.size * s_item))
    vmem_limit = int(min(max(int(1.4 * vmem_est), 32 * _MiB), limit_ceiling))

    in_specs = [
        pl.BlockSpec((1, tile_i, c_s), lambda b, i, j: (b, i, 0)),
        pl.BlockSpec((1, 1, 1, tile_j * c_out), lambda b, i, j: (b, j, 0, 0)),
        _spec((1, tile_i, tile_j * c_z), lambda b, i, j: (b, i, j),
              buffers=z_buffers, supported=pm_ok),
        _spec((c_s, tile_j * c_out), lambda b, i, j: (0, 0),
              buffers=1, supported=pm_ok),           # grid-invariant: single buffer
        _spec((tile_j * c_z, tile_j * c_out), lambda b, i, j: (0, 0),
              buffers=1, supported=pm_ok),           # grid-invariant: single buffer
    ]

    out_flat = pl.pallas_call(
        _inter_contact_kernel,
        out_shape=jax.ShapeDtypeStruct((B, N, n_pad * c_out), out_dtype),
        grid_spec=pltpu.PrefetchScalarGridSpec(
            num_scalar_prefetch=0,
            grid=grid,
            in_specs=in_specs,
            out_specs=pl.BlockSpec((1, tile_i, tile_j * c_out),
                                   lambda b, i, j: (b, i, j)),
        ),
        compiler_params=pltpu.CompilerParams(
            dimension_semantics=("parallel", "parallel", "parallel"),
            vmem_limit_bytes=vmem_limit,
        ),
        cost_estimate=pl.CostEstimate(flops=flops, transcendentals=0,
                                      bytes_accessed=bytes_accessed),
    )(s, sj_rows, z_flat, wi_tiled, wz_exp)

    out = out_flat.reshape(B, N, n_pad, c_out)
    if n_pad != N:
        out = out[:, :, :N, :]
    return out


def _reference(s, z, w, bias):
    B, N, c_s = s.shape
    s_i = jnp.broadcast_to(s[:, :, None, :], (B, N, N, c_s))
    s_j = jnp.broadcast_to(s[:, None, :, :], (B, N, N, c_s))
    joined = jnp.concatenate([s_i, s_j, z], axis=-1)
    return joined @ w + bias


if __name__ == "__main__":
    # Small shapes consistent with the module's forward (c_out=1: boolean contact map).
    B, N, c_s, c_z, c_out = 2, 128, 16, 8, 1

    key = jax.random.PRNGKey(0)
    k_s, k_z, k_w, k_b = jax.random.split(key, 4)

    s = jax.random.normal(k_s, (B, N, c_s), dtype=jnp.float32)
    z = jax.random.normal(k_z, (B, N, N, c_z), dtype=jnp.float32)

    # Parameters: Linear(2*c_s + c_z, c_out). The original uses init='final'
    # (zero init); use a deterministic small random init so the kernel
    # exercises a nontrivial compute path.
    w = 0.02 * jax.random.normal(k_w, (2 * c_s + c_z, c_out), dtype=jnp.float32)
    bias = 0.01 * jax.random.normal(k_b, (c_out,), dtype=jnp.float32)

    # tile_i is auto-picked (=128 here); no tiny-M tiles.
    out = inter_contact_head(s, z, w, bias)
    out = jax.block_until_ready(out)

    ref = _reference(s, z, w, bias)
    assert out.shape == (B, N, N, c_out)
    assert jnp.allclose(out, ref, atol=2e-5, rtol=2e-5), \
        float(jnp.max(jnp.abs(out - ref)))

    print("KERNEL_OK")
</pallas_src>

<mosaic_0001>
module attributes {stable_mosaic.version = 11 : i64} {
  func.func @_inter_contact_kernel(%arg0: i32, %arg1: i32, %arg2: i32, %arg3: memref<1x128x16xf32, #tpu.memory_space<vmem>>, %arg4: memref<1x1x1x128xf32, #tpu.memory_space<vmem>>, %arg5: memref<1x128x1024xf32, #tpu.memory_space<vmem>>, %arg6: memref<16x128xf32, #tpu.memory_space<vmem>>, %arg7: memref<1024x128xf32, #tpu.memory_space<vmem>>, %arg8: memref<1x128x128xf32, #tpu.memory_space<vmem>>) attributes {dimension_semantics = [#tpu.dimension_semantics<parallel>, #tpu.dimension_semantics<parallel>, #tpu.dimension_semantics<parallel>], iteration_bounds = array<i64: 2, 1, 1>, scalar_prefetch = 0 : i64, scratch_operands = 0 : i64, tpu.core_type = #tpu.core_type<tc>, window_params = [{transform_indices = @transform_0, window_bounds = array<i64: 1, 128, 16>}, {transform_indices = @transform_1, window_bounds = array<i64: 1, 1, 1, 128>}, {transform_indices = @transform_2, window_bounds = array<i64: 1, 128, 1024>}, {pipeline_mode = #tpu.pipeline_mode<synchronous>, transform_indices = @transform_3, window_bounds = array<i64: 16, 128>}, {pipeline_mode = #tpu.pipeline_mode<synchronous>, transform_indices = @transform_4, window_bounds = array<i64: 1024, 128>}, {transform_indices = @transform_5, window_bounds = array<i64: 1, 128, 128>}]} {
    %c0 = arith.constant 0 : index
    %c0_0 = arith.constant 0 : index
    %c0_1 = arith.constant 0 : index
    %0 = vector.load %arg5[%c0, %c0_0, %c0_1] : memref<1x128x1024xf32, #tpu.memory_space<vmem>>, vector<1x128x1024xf32>
    %1 = vector.shape_cast %0 : vector<1x128x1024xf32> to vector<128x1024xf32>
    %c0_2 = arith.constant 0 : index
    %c0_3 = arith.constant 0 : index
    %2 = vector.load %arg7[%c0_2, %c0_3] : memref<1024x128xf32, #tpu.memory_space<vmem>>, vector<1024x128xf32>
    %cst = arith.constant dense<0.000000e+00> : vector<128x128xf32>
    %3 = tpu.matmul %1, %2, %cst {dimension_numbers = #tpu.dot_dimension_numbers<[1], [0], [0], [1], [0, 0, 1, 1], [], []>} : vector<128x1024xf32>, vector<1024x128xf32>, vector<128x128xf32> -> vector<128x128xf32>
    %c0_4 = arith.constant 0 : index
    %c0_5 = arith.constant 0 : index
    %c0_6 = arith.constant 0 : index
    %4 = vector.load %arg3[%c0_4, %c0_5, %c0_6] : memref<1x128x16xf32, #tpu.memory_space<vmem>>, vector<1x128x16xf32>
    %5 = vector.shape_cast %4 : vector<1x128x16xf32> to vector<128x16xf32>
    %c0_7 = arith.constant 0 : index
    %c0_8 = arith.constant 0 : index
    %6 = vector.load %arg6[%c0_7, %c0_8] : memref<16x128xf32, #tpu.memory_space<vmem>>, vector<16x128xf32>
    %cst_9 = arith.constant dense<0.000000e+00> : vector<128x128xf32>
    %7 = tpu.matmul %5, %6, %cst_9 {dimension_numbers = #tpu.dot_dimension_numbers<[1], [0], [0], [1], [0, 0, 1, 1], [], []>} : vector<128x16xf32>, vector<16x128xf32>, vector<128x128xf32> -> vector<128x128xf32>
    %8 = arith.addf %3, %7 : vector<128x128xf32>
    %c0_10 = arith.constant 0 : index
    %c0_11 = arith.constant 0 : index
    %c0_12 = arith.constant 0 : index
    %c0_13 = arith.constant 0 : index
    %9 = vector.load %arg4[%c0_10, %c0_11, %c0_12, %c0_13] : memref<1x1x1x128xf32, #tpu.memory_space<vmem>>, vector<1x1x1x128xf32>
    %10 = vector.shape_cast %9 : vector<1x1x1x128xf32> to vector<1x128xf32>
    %11 = vector.broadcast %10 : vector<1x128xf32> to vector<128x128xf32>
    %12 = arith.addf %8, %11 : vector<128x128xf32>
    %c0_14 = arith.constant 0 : index
    %c0_15 = arith.constant 0 : index
    %c0_16 = arith.constant 0 : index
    %13 = vector.load %arg8[%c0_14, %c0_15, %c0_16] : memref<1x128x128xf32, #tpu.memory_space<vmem>>, vector<1x128x128xf32>
    %14 = vector.shape_cast %13 : vector<1x128x128xf32> to vector<128x128xf32>
    %15 = vector.shape_cast %12 : vector<128x128xf32> to vector<1x128x128xf32>
    tpu.vector_store %arg8[%c0_14, %c0_15, %c0_16], %15 {strides = array<i32>} : memref<1x128x128xf32, #tpu.memory_space<vmem>>, vector<1x128x128xf32>,
    return
  }
  func.func @transform_0(%arg0: i32, %arg1: i32, %arg2: i32) -> (i32, i32, i32) {
    %c0_i32 = arith.constant 0 : i32
    %c0_i32_0 = arith.constant 0 : i32
    return %arg0, %arg1, %c0_i32 : i32, i32, i32
  }
  func.func @transform_1(%arg0: i32, %arg1: i32, %arg2: i32) -> (i32, i32, i32, i32) {
    %c0_i32 = arith.constant 0 : i32
    %c0_i32_0 = arith.constant 0 : i32
    %c0_i32_1 = arith.constant 0 : i32
    return %arg0, %arg2, %c0_i32, %c0_i32_0 : i32, i32, i32, i32
  }
  func.func @transform_2(%arg0: i32, %arg1: i32, %arg2: i32) -> (i32, i32, i32) {
    %c0_i32 = arith.constant 0 : i32
    return %arg0, %arg1, %arg2 : i32, i32, i32
  }
  func.func @transform_3(%arg0: i32, %arg1: i32, %arg2: i32) -> (i32, i32) {
    %c0_i32 = arith.constant 0 : i32
    %c0_i32_0 = arith.constant 0 : i32
    %c0_i32_1 = arith.constant 0 : i32
    return %c0_i32, %c0_i32_0 : i32, i32
  }
  func.func @transform_4(%arg0: i32, %arg1: i32, %arg2: i32) -> (i32, i32) {
    %c0_i32 = arith.constant 0 : i32
    %c0_i32_0 = arith.constant 0 : i32
    %c0_i32_1 = arith.constant 0 : i32
    return %c0_i32, %c0_i32_0 : i32, i32
  }
  func.func @transform_5(%arg0: i32, %arg1: i32, %arg2: i32) -> (i32, i32, i32) {
    %c0_i32 = arith.constant 0 : i32
    return %arg0, %arg1, %arg2 : i32, i32, i32
  }
}

</mosaic_0001>

<llo_original>
// kernel: tpu_custom_call.1
$region0: #{tpu_custom_call.1}
  #allocation0 [shape = 'u32[]', space=smem, size = 0x4, offset = 0x4, fixed_abs, tag = 'smem constant byte address 0x4 - core index']
  #allocation1 [shape = 'u32[144,128]{1,0:T(1,128)}', space=vmem, size = 0x12000, scoped, tag = 'internal scratch']
  %s0 = inlined_call_operand.vmem [shape: f32[2,128,16], index: 0, kind: input, shape index: {}]
  %s1 = inlined_call_operand.vmem [shape: f32[2,1,1,128], index: 1, kind: input, shape index: {}]
  %s2 = inlined_call_operand.hbm [shape: f32[2,128,1024], index: 2, kind: input, shape index: {}]
  %s3 = inlined_call_operand.vmem [shape: f32[16,128], index: 3, kind: input, shape index: {}]
  %s4 = inlined_call_operand.hbm [shape: f32[1024,128], index: 4, kind: input, shape index: {}]
  %s5 = inlined_call_operand.hbm [shape: f32[2,128,128], index: 5, kind: output, shape index: {}]
  %s6 = sld [smem:[#allocation0]]
  $region61: #{tpu_custom_call.1} parent=0
    _
  %s8 = ssub.s32 1, %s6
  %s9 = scalar_select 0, %s8, %s6
  $region1: #{tpu_custom_call.1} parent=0
    #allocation2 [shape = 'u8[1048576]{0}', space=vmem, size = 0x100000, scoped, tag = 'input window, operand 2']
    #allocation3 [shape = 's32[2]{0}', space=sflag, size = 0x8, scoped, tag = 'scoped memory for tpu_custom_call.1']
    #allocation4 [shape = 's32[2]{0}', space=sflag, size = 0x8, scoped, tag = 'scoped memory for tpu_custom_call.1']
    #allocation5 [shape = 'u8[524288]{0}', space=vmem, size = 0x80000, scoped, tag = 'input window, operand 4, single buffered']
    #allocation6 [shape = 's32[1]{0}', space=sflag, size = 0x4, scoped, tag = 'scoped memory for tpu_custom_call.1']
    #allocation7 [shape = 'u8[131072]{0}', space=vmem, size = 0x20000, scoped, tag = 'output window, operand 0']
    %10 = vsyncpa [#allocation3], 0
    %s11 = scalar_lea.sflag [#allocation3], 1
    %12 = vsyncpa %s11, 0
    %13 = vsyncpa [#allocation6], 0
    %14 = vsyncpa [#allocation4], 0
    %s15 = scalar_lea.sflag [#allocation4], 1
    %16 = vsyncpa %s15, 0
    loop: start=0, step=1, limit=4
    $region2: #{tpu_custom_call.1} parent=1 // loop_pre_header
      _
    $region3: #{tpu_custom_call.1} parent=1 // loop_header
      %s18 = sphi 0, %s22
      %p19 = scmp.ge.s32.totalorder %s18, 4
      %s25 = sphi 0, %s44
      %s26 = sphi 0, %s40
      %s27 = sphi 0, %s36
      %s28 = sphi 0, %s25
      %s29 = sphi 0, %s26
      %s30 = sphi 0, %s27
      %s31 = sphi 0, %s28
      %s32 = sphi 0, %s29
      %s33 = sphi 0, %s30
      %s49 = sphi 0, %s51
      %s52 = sphi 0, %s49
      %s53 = sphi 0, %s52
      %s69 = sphi 0, %s53
      %s77 = sphi 0, %s79
      %s80 = sphi 0, %s77
      %s81 = sphi 0, %s80
      %s97 = sphi 0, %s81
      %s107 = sphi 0, %s109
      %s110 = sphi 0, %s107
      %s111 = sphi 0, %s110
      %s127 = sphi 0, %s111
      %s131 = sphi 0, %s131
      %s133 = sphi 0, %s131
      %s134 = sphi 0, %s133
      %s148 = sphi 0, %s134
      %s152 = sphi 0, %s152
      %s154 = sphi 0, %s152
      %s155 = sphi 0, %s154
      %s169 = sphi 0, %s155
      %s179 = sphi 0, %s181
      %s182 = sphi 0, %s179
      %s183 = sphi 0, %s182
      %s199 = sphi 0, %s183
    $region4: #{tpu_custom_call.1} parent=1 // loop_header_branch
      %21 = sbr.rel (%p19) target = $region8
    $region5: #{tpu_custom_call.1} parent=1 // loop_body
      %s23 = ssub.s32 %s18, 1
      %s24 = ssub.s32 %s18, 2
      %s34 = sadd.s32 1, %s27
      %p35 = scmp.ge.s32.totalorder %s34, 1
      %s36 = scalar_select %p35, 0, %s34
      %s37 = sadd.s32 1, %s26
      %s38 = scalar_select %p35, %s37, %s26
      %p39 = scmp.ge.s32.totalorder %s38, 1
      %s40 = scalar_select %p39, 0, %s38
      %s41 = sadd.s32 1, %s25
      %s42 = scalar_select %p39, %s41, %s25
      %p43 = scmp.ge.s32.totalorder %s42, 2
      %s44 = scalar_select %p43, 0, %s42
      %s45 = ssub.s32 %s25, %s44
      %s46 = ssub.s32 %s26, %s40
      %s47 = sor.u32 %s45, %s46
      %p48 = scmp.eq.s32.totalorder %s47, 0
      %s50 = sadd.s32 %s49, 1
      %s51 = scalar_select %p48, %s49, %s50
      %p54 = pneg %p48
      %p55 = scmp.eq.s32.totalorder %s18, 1
      %p56 = por %p54, %p55
      %p57 = scmp.ne.s32.totalorder %s49, %s52
      %p58 = scmp.eq.s32.totalorder %s18, 0
      %p59 = por %p57, %p58
      %p60 = scmp.ne.s32.totalorder %s49, %s52
      %p61 = scmp.eq.s32.totalorder %s23, 1
      %p62 = por %p60, %p61
      %p63 = scmp.ne.s32.totalorder %s52, %s53
      %p64 = scmp.eq.s32.totalorder %s23, 0
      %p65 = por %p63, %p64
      %p66 = scmp.ne.s32.totalorder %s52, %s53
      %p67 = scmp.eq.s32.totalorder %s24, 1
      %p68 = por %p66, %p67
      %p70 = scmp.ne.s32.totalorder %s53, %s69
      %p71 = scmp.eq.s32.totalorder %s24, 0
      %p72 = por %p70, %p71
      %s73 = ssub.s32 %s25, %s44
      %s74 = ssub.s32 %s27, %s36
      %s75 = sor.u32 %s73, %s74
      %p76 = scmp.eq.s32.totalorder %s75, 0
      %s78 = sadd.s32 %s77, 1
      %s79 = scalar_select %p76, %s77, %s78
      %p82 = pneg %p76
      %p83 = scmp.eq.s32.totalorder %s18, 1
      %p84 = por %p82, %p83
      %p85 = scmp.ne.s32.totalorder %s77, %s80
      %p86 = scmp.eq.s32.totalorder %s18, 0
      %p87 = por %p85, %p86
      %p88 = scmp.ne.s32.totalorder %s77, %s80
      %p89 = scmp.eq.s32.totalorder %s23, 1
      %p90 = por %p88, %p89
      %p91 = scmp.ne.s32.totalorder %s80, %s81
      %p92 = scmp.eq.s32.totalorder %s23, 0
      %p93 = por %p91, %p92
      %p94 = scmp.ne.s32.totalorder %s80, %s81
      %p95 = scmp.eq.s32.totalorder %s24, 1
      %p96 = por %p94, %p95
      %p98 = scmp.ne.s32.totalorder %s81, %s97
      %p99 = scmp.eq.s32.totalorder %s24, 0
      %p100 = por %p98, %p99
      %s101 = ssub.s32 %s25, %s44
      %s102 = ssub.s32 %s26, %s40
      %s103 = sor.u32 %s101, %s102
      %s104 = ssub.s32 %s27, %s36
      %s105 = sor.u32 %s103, %s104
      %p106 = scmp.eq.s32.totalorder %s105, 0
      %s108 = sadd.s32 %s107, 1
      %s109 = scalar_select %p106, %s107, %s108
      %p112 = pneg %p106
      %p113 = scmp.eq.s32.totalorder %s18, 1
      %p114 = por %p112, %p113
      %p115 = scmp.ne.s32.totalorder %s107, %s110
      %p116 = scmp.eq.s32.totalorder %s18, 0
      %p117 = por %p115, %p116
      %p118 = scmp.ne.s32.totalorder %s107, %s110
      %p119 = scmp.eq.s32.totalorder %s23, 1
      %p120 = por %p118, %p119
      %p121 = scmp.ne.s32.totalorder %s110, %s111
      %p122 = scmp.eq.s32.totalorder %s23, 0
      %p123 = por %p121, %p122
      %p124 = scmp.ne.s32.totalorder %s110, %s111
      %p125 = scmp.eq.s32.totalorder %s24, 1
      %p126 = por %p124, %p125
      %p128 = scmp.ne.s32.totalorder %s111, %s127
      %p129 = scmp.eq.s32.totalorder %s24, 0
      %p130 = por %p128, %p129
      %s132 = sadd.s32 %s131, 1
      %p135 = scmp.eq.s32.totalorder %s18, 1
      %p136 = scmp.ne.s32.totalorder %s131, %s133
      %p137 = scmp.eq.s32.totalorder %s18, 0
      %p138 = por %p136, %p137
      %p139 = scmp.ne.s32.totalorder %s131, %s133
      %p140 = scmp.eq.s32.totalorder %s23, 1
      %p141 = por %p139, %p140
      %p142 = scmp.ne.s32.totalorder %s133, %s134
      %p143 = scmp.eq.s32.totalorder %s23, 0
      %p144 = por %p142, %p143
      %p145 = scmp.ne.s32.totalorder %s133, %s134
      %p146 = scmp.eq.s32.totalorder %s24, 1
      %p147 = por %p145, %p146
      %p149 = scmp.ne.s32.totalorder %s134, %s148
      %p150 = scmp.eq.s32.totalorder %s24, 0
      %p151 = por %p149, %p150
      %s153 = sadd.s32 %s152, 1
      %p156 = scmp.eq.s32.totalorder %s18, 1
      %p157 = scmp.ne.s32.totalorder %s152, %s154
      %p158 = scmp.eq.s32.totalorder %s18, 0
      %p159 = por %p157, %p158
      %p160 = scmp.ne.s32.totalorder %s152, %s154
      %p161 = scmp.eq.s32.totalorder %s23, 1
      %p162 = por %p160, %p161
      %p163 = scmp.ne.s32.totalorder %s154, %s155
      %p164 = scmp.eq.s32.totalorder %s23, 0
      %p165 = por %p163, %p164
      %p166 = scmp.ne.s32.totalorder %s154, %s155
      %p167 = scmp.eq.s32.totalorder %s24, 1
      %p168 = por %p166, %p167
      %p170 = scmp.ne.s32.totalorder %s155, %s169
      %p171 = scmp.eq.s32.totalorder %s24, 0
      %p172 = por %p170, %p171
      %s173 = ssub.s32 %s25, %s44
      %s174 = ssub.s32 %s26, %s40
      %s175 = sor.u32 %s173, %s174
      %s176 = ssub.s32 %s27, %s36
      %s177 = sor.u32 %s175, %s176
      %p178 = scmp.eq.s32.totalorder %s177, 0
      %s180 = sadd.s32 %s179, 1
      %s181 = scalar_select %p178, %s179, %s180
      %p184 = pneg %p178
      %p185 = scmp.eq.s32.totalorder %s18, 1
      %p186 = por %p184, %p185
      %p187 = scmp.ne.s32.totalorder %s179, %s182
      %p188 = scmp.eq.s32.totalorder %s18, 0
      %p189 = por %p187, %p188
      %p190 = scmp.ne.s32.totalorder %s179, %s182
      %p191 = scmp.eq.s32.totalorder %s23, 1
      %p192 = por %p190, %p191
      %p193 = scmp.ne.s32.totalorder %s182, %s183
      %p194 = scmp.eq.s32.totalorder %s23, 0
      %p195 = por %p193, %p194
      %p196 = scmp.ne.s32.totalorder %s182, %s183
      %p197 = scmp.eq.s32.totalorder %s24, 1
      %p198 = por %p196, %p197
      %p200 = scmp.ne.s32.totalorder %s183, %s199
      %p201 = scmp.eq.s32.totalorder %s24, 0
      %p202 = por %p200, %p201
      %p203 = scmp.le.s32.totalorder 1, %s18
      %p204 = scmp.lt.s32.totalorder %s18, 3
      %p205 = pnand %p203, %p204
      %p206 = pneg %p205
      // Predicated region
      $region9: #{tpu_custom_call.1} parent=5 // pred_check
        _
      $region10: #{tpu_custom_call.1} parent=5 // pred_check_branch
        %208 = sbr.rel (%p205) target = $region12
      $region11: #{tpu_custom_call.1} parent=5 // pred_region
        %s209 = ssub.s32 %s18, 1
        // Predicated region
        $region13: #{tpu_custom_call.1} parent=11 // pred_check
          %p210 = pneg %p144
        $region14: #{tpu_custom_call.1} parent=11 // pred_check_branch
          %212 = sbr.rel (%p210) target = $region16
        $region15: #{tpu_custom_call.1} parent=11 // pred_region
          _
        $region16: #{tpu_custom_call.1} parent=11 // pred_fallthru
          _
        // Predicated region
        $region17: #{tpu_custom_call.1} parent=11 // pred_check
          %p213 = pneg %p165
        $region18: #{tpu_custom_call.1} parent=11 // pred_check_branch
          %215 = sbr.rel (%p213) target = $region20
        $region19: #{tpu_custom_call.1} parent=11 // pred_region
          %s217 = ssub.s32 16384, 16384
          %218 = vsyncadd [#allocation6], %s217
          %s219 = sshll.u32 [#allocation5], 4
          %s220 = int_to_ptr.vmem [resolvable:$true] %s219
          %225 = dma.hbm_to_vmem [thread:$0]  %s4, 16384, %s220, [#allocation6], 128, 128, 8
        $region20: #{tpu_custom_call.1} parent=11 // pred_fallthru
          _
      $region12: #{tpu_custom_call.1} parent=5 // pred_fallthru
        _
      %p226 = scmp.lt.s32.totalorder %s18, 2
      // Predicated region
      $region21: #{tpu_custom_call.1} parent=5 // pred_check
        %p227 = pneg %p226
      $region22: #{tpu_custom_call.1} parent=5 // pred_check_branch
        %229 = sbr.rel (%p227) target = $region24
      $region23: #{tpu_custom_call.1} parent=5 // pred_region
        // Predicated region
        $region25: #{tpu_custom_call.1} parent=23 // pred_check
          %p230 = pneg %p59
        $region26: #{tpu_custom_call.1} parent=23 // pred_check_branch
          %232 = sbr.rel (%p230) target = $region28
        $region27: #{tpu_custom_call.1} parent=23 // pred_region
          %s233 = smul.u32 16, %s26
          %p234 = scmp.lt.s32.totalorder %s25, 1
          %s235 = scalar_select %p234, %s25, 1
          %p236 = scmp.lt.s32.totalorder %s233, 15
          %s237 = scalar_select %p236, %s233, 15
          %s238 = smul.addr %s235, 16
          %s239 = sadd.s32 %s237, %s238
          %s240 = smul.addr %s239, 8
          %s241 = scalar_lea.vmem %s0, %s240
          %s242 = smul.u32 16, %s26
        $region28: #{tpu_custom_call.1} parent=23 // pred_fallthru
          _
        // Predicated region
        $region29: #{tpu_custom_call.1} parent=23 // pred_check
          %p243 = pneg %p87
        $region30: #{tpu_custom_call.1} parent=23 // pred_check_branch
          %245 = sbr.rel (%p243) target = $region32
        $region31: #{tpu_custom_call.1} parent=23 // pred_region
          %p246 = scmp.lt.s32.totalorder %s25, 1
          %s247 = scalar_select %p246, %s25, 1
          %p248 = scmp.lt.s32.totalorder %s27, 0
          %s249 = scalar_select %p248, %s27, 0
          %s250 = sadd.s32 %s249, %s247
          %s251 = scalar_lea.vmem %s1, %s250
        $region32: #{tpu_custom_call.1} parent=23 // pred_fallthru
          _
        // Predicated region
        $region33: #{tpu_custom_call.1} parent=23 // pred_check
          %p252 = pneg %p117
        $region34: #{tpu_custom_call.1} parent=23 // pred_check_branch
          %254 = sbr.rel (%p252) target = $region36
        $region35: #{tpu_custom_call.1} parent=23 // pred_region
          %s255 = sand.u32 %s107, 1
          %s256 = scalar_lea.sflag [#allocation3], %s255
          %s257 = sand.u32 %s107, 1
          %s258 = smul.addr %s257, 1024
          %s259 = scalar_lea.vmem [#allocation2], %s258
          %s260 = smul.u32 16, %s26
          %s261 = smul.u32 8, %s27
          %s263 = ssub.s32 16384, 16384
          %264 = vsyncadd %s256, %s263
          %s265 = smul.addr %s260, 8
          %s266 = sadd.s32 %s261, %s265
          %s267 = smul.addr %s25, 128
          %s268 = sadd.s32 %s266, %s267
          %s269 = smul.addr %s268, 128
          %s270 = scalar_lea.hbm %s2, %s269
          %s271 = sshll.u32 %s259, 4
          %s272 = int_to_ptr.vmem [resolvable:$true] %s271
          %277 = dma.hbm_to_vmem [thread:$0]  %s270, 16384, %s272, %s256, 1024, 1024, 64
        $region36: #{tpu_custom_call.1} parent=23 // pred_fallthru
          _
      $region24: #{tpu_custom_call.1} parent=5 // pred_fallthru
        _
      %p278 = scmp.le.s32.totalorder 1, %s18
      %p279 = scmp.lt.s32.totalorder %s18, 3
      %p280 = pnand %p278, %p279
      %p281 = pneg %p280
      // Predicated region
      $region37: #{tpu_custom_call.1} parent=5 // pred_check
        _
      $region38: #{tpu_custom_call.1} parent=5 // pred_check_branch
        %283 = sbr.rel (%p280) target = $region40
      $region39: #{tpu_custom_call.1} parent=5 // pred_region
        %s284 = ssub.s32 %s18, 1
        %s285 = sand.u32 %s110, 1
        %s286 = scalar_lea.sflag [#allocation3], %s285
        %s287 = sand.u32 %s110, 1
        %s288 = smul.addr %s287, 1024
        %s289 = scalar_lea.vmem [#allocation2], %s288
        // Predicated region
        $region41: #{tpu_custom_call.1} parent=39 // pred_check
          %p290 = pneg %p123
        $region42: #{tpu_custom_call.1} parent=39 // pred_check_branch
          %292 = sbr.rel (%p290) target = $region44
        $region43: #{tpu_custom_call.1} parent=39 // pred_region
          %293 = dma.done %s286, 16384
        $region44: #{tpu_custom_call.1} parent=39 // pred_fallthru
          _
        // Predicated region
        $region45: #{tpu_custom_call.1} parent=39 // pred_check
          %p294 = pneg %p165
        $region46: #{tpu_custom_call.1} parent=39 // pred_check_branch
          %296 = sbr.rel (%p294) target = $region48
        $region47: #{tpu_custom_call.1} parent=39 // pred_region
          %297 = dma.done [#allocation6], 16384
        $region48: #{tpu_custom_call.1} parent=39 // pred_fallthru
          _
        %s298 = smul.u32 16, %s29
        %p299 = scmp.lt.s32.totalorder %s28, 1
        %s300 = scalar_select %p299, %s28, 1
        %p301 = scmp.lt.s32.totalorder %s298, 15
        %s302 = scalar_select %p301, %s298, 15
        %s303 = smul.addr %s300, 16
        %s304 = sadd.s32 %s302, %s303
        %s305 = smul.addr %s304, 8
        %s306 = scalar_lea.vmem %s0, %s305
        %p307 = pneg %p65
        %p308 = pneg %p62
        %p309 = scmp.lt.s32.totalorder %s28, 1
        %s310 = scalar_select %p309, %s28, 1
        %p311 = scmp.lt.s32.totalorder %s30, 0
        %s312 = scalar_select %p311, %s30, 0
        %s313 = sadd.s32 %s312, %s310
        %s314 = scalar_lea.vmem %s1, %s313
        %p315 = pneg %p93
        %p316 = pneg %p90
        %s317 = sand.u32 %s110, 1
        %s318 = scalar_lea.sflag [#allocation3], %s317
        %s319 = sand.u32 %s110, 1
        %s320 = smul.addr %s319, 1024
        %s321 = scalar_lea.vmem [#allocation2], %s320
        %p322 = pneg %p123
        %p323 = pneg %p120
        %p324 = pneg %p144
        %p325 = pneg %p141
        %p326 = pneg %p165
        %p327 = pneg %p162
        %p328 = pneg %p195
        %p329 = pneg %p192
        %s330 = sand.u32 %s182, 1
        %s331 = scalar_lea.sflag [#allocation4], %s330
        %s332 = sand.u32 %s182, 1
        %s333 = smul.addr %s332, 128
        %s334 = scalar_lea.vmem [#allocation7], %s333
        %s335 = smul.u32 16, %s29
        %p336 = scmp.lt.s32.totalorder %s28, 1
        %s337 = scalar_select %p336, %s28, 1
        %p338 = scmp.lt.s32.totalorder %s335, 15
        %s339 = scalar_select %p338, %s335, 15
        %s340 = smul.addr %s337, 16
        %s341 = sadd.s32 %s339, %s340
        %s342 = smul.addr %s341, 8
        %s343 = scalar_lea.vmem %s0, %s342
        %s344 = smul.u32 16, %s29
        %p345 = scmp.lt.s32.totalorder %s28, 1
        %s346 = scalar_select %p345, %s28, 1
        %p347 = scmp.lt.s32.totalorder %s30, 0
        %s348 = scalar_select %p347, %s30, 0
        %s349 = sadd.s32 %s348, %s346
        %s350 = scalar_lea.vmem %s1, %s349
        %s351 = smul.u32 16, %s29
        %s352 = smul.u32 8, %s30
        %s353 = smul.u32 16, %s29
        %v354 = vld [vmem:[%s289] sm:$0xff]
        %v355 = vld [vmem:[%s289 + $0x8] sm:$0xff]
        %v356 = vld [vmem:[%s289 + $0x10] sm:$0xff]
        %v357 = vld [vmem:[%s289 + $0x18] sm:$0xff]
        %v358 = vld [vmem:[%s289 + $0x20] sm:$0xff]
        %v359 = vld [vmem:[%s289 + $0x28] sm:$0xff]
        %v360 = vld [vmem:[%s289 + $0x30] sm:$0xff]
        %v361 = vld [vmem:[%s289 + $0x38] sm:$0xff]
        %v362 = vld [vmem:[%s289 + $0x40] sm:$0xff]
        %v363 = vld [vmem:[%s289 + $0x48] sm:$0xff]
        %v364 = vld [vmem:[%s289 + $0x50] sm:$0xff]
        %v365 = vld [vmem:[%s289 + $0x58] sm:$0xff]
        %v366 = vld [vmem:[%s289 + $0x60] sm:$0xff]
        %v367 = vld [vmem:[%s289 + $0x68] sm:$0xff]
        %v368 = vld [vmem:[%s289 + $0x70] sm:$0xff]
        %v369 = vld [vmem:[%s289 + $0x78] sm:$0xff]
        %v370 = vld [vmem:[%s289 + $0x80] sm:$0xff]
        %v371 = vld [vmem:[%s289 + $0x88] sm:$0xff]
        %v372 = vld [vmem:[%s289 + $0x90] sm:$0xff]
        %v373 = vld [vmem:[%s289 + $0x98] sm:$0xff]
        %v374 = vld [vmem:[%s289 + $0xa0] sm:$0xff]
        %v375 = vld [vmem:[%s289 + $0xa8] sm:$0xff]
        %v376 = vld [vmem:[%s289 + $0xb0] sm:$0xff]
        %v377 = vld [vmem:[%s289 + $0xb8] sm:$0xff]
        %v378 = vld [vmem:[%s289 + $0xc0] sm:$0xff]
        %v379 = vld [vmem:[%s289 + $0xc8] sm:$0xff]
        %v380 = vld [vmem:[%s289 + $0xd0] sm:$0xff]
        %v381 = vld [vmem:[%s289 + $0xd8] sm:$0xff]
        %v382 = vld [vmem:[%s289 + $0xe0] sm:$0xff]
        %v383 = vld [vmem:[%s289 + $0xe8] sm:$0xff]
        %v384 = vld [vmem:[%s289 + $0xf0] sm:$0xff]
        %v385 = vld [vmem:[%s289 + $0xf8] sm:$0xff]
        %v386 = vld [vmem:[%s289 + $0x100] sm:$0xff]
        %v387 = vld [vmem:[%s289 + $0x108] sm:$0xff]
        %v388 = vld [vmem:[%s289 + $0x110] sm:$0xff]
        %v389 = vld [vmem:[%s289 + $0x118] sm:$0xff]
        %v390 = vld [vmem:[%s289 + $0x120] sm:$0xff]
        %v391 = vld [vmem:[%s289 + $0x128] sm:$0xff]
        %v392 = vld [vmem:[%s289 + $0x130] sm:$0xff]
        %v393 = vld [vmem:[%s289 + $0x138] sm:$0xff]
        %v394 = vld [vmem:[%s289 + $0x140] sm:$0xff]
        %v395 = vld [vmem:[%s289 + $0x148] sm:$0xff]
        %v396 = vld [vmem:[%s289 + $0x150] sm:$0xff]
        %v397 = vld [vmem:[%s289 + $0x158] sm:$0xff]
        %v398 = vld [vmem:[%s289 + $0x160] sm:$0xff]
        %v399 = vld [vmem:[%s289 + $0x168] sm:$0xff]
        %v400 = vld [vmem:[%s289 + $0x170] sm:$0xff]
        %v401 = vld [vmem:[%s289 + $0x178] sm:$0xff]
        %v402 = vld [vmem:[%s289 + $0x180] sm:$0xff]
        %v403 = vld [vmem:[%s289 + $0x188] sm:$0xff]
        %v404 = vld [vmem:[%s289 + $0x190] sm:$0xff]
        %v405 = vld [vmem:[%s289 + $0x198] sm:$0xff]
        %v406 = vld [vmem:[%s289 + $0x1a0] sm:$0xff]
        %v407 = vld [vmem:[%s289 + $0x1a8] sm:$0xff]
        %v408 = vld [vmem:[%s289 + $0x1b0] sm:$0xff]
        %v409 = vld [vmem:[%s289 + $0x1b8] sm:$0xff]
        %v410 = vld [vmem:[%s289 + $0x1c0] sm:$0xff]
        %v411 = vld [vmem:[%s289 + $0x1c8] sm:$0xff]
        %v412 = vld [vmem:[%s289 + $0x1d0] sm:$0xff]
        %v413 = vld [vmem:[%s289 + $0x1d8] sm:$0xff]
        %v414 = vld [vmem:[%s289 + $0x1e0] sm:$0xff]
        %v415 = vld [vmem:[%s289 + $0x1e8] sm:$0xff]
        %v416 = vld [vmem:[%s289 + $0x1f0] sm:$0xff]
        %v417 = vld [vmem:[%s289 + $0x1f8] sm:$0xff]
        %v418 = vld [vmem:[%s289 + $0x200] sm:$0xff]
        %v419 = vld [vmem:[%s289 + $0x208] sm:$0xff]
        %v420 = vld [vmem:[%s289 + $0x210] sm:$0xff]
        %v421 = vld [vmem:[%s289 + $0x218] sm:$0xff]
        %v422 = vld [vmem:[%s289 + $0x220] sm:$0xff]
        %v423 = vld [vmem:[%s289 + $0x228] sm:$0xff]
        %v424 = vld [vmem:[%s289 + $0x230] sm:$0xff]
        %v425 = vld [vmem:[%s289 + $0x238] sm:$0xff]
        %v426 = vld [vmem:[%s289 + $0x240] sm:$0xff]
        %v427 = vld [vmem:[%s289 + $0x248] sm:$0xff]
        %v428 = vld [vmem:[%s289 + $0x250] sm:$0xff]
        %v429 = vld [vmem:[%s289 + $0x258] sm:$0xff]
        %v430 = vld [vmem:[%s289 + $0x260] sm:$0xff]
        %v431 = vld [vmem:[%s289 + $0x268] sm:$0xff]
        %v432 = vld [vmem:[%s289 + $0x270] sm:$0xff]
        %v433 = vld [vmem:[%s289 + $0x278] sm:$0xff]
        %v434 = vld [vmem:[%s289 + $0x280] sm:$0xff]
        %v435 = vld [vmem:[%s289 + $0x288] sm:$0xff]
        %v436 = vld [vmem:[%s289 + $0x290] sm:$0xff]
        %v437 = vld [vmem:[%s289 + $0x298] sm:$0xff]
        %v438 = vld [vmem:[%s289 + $0x2a0] sm:$0xff]
        %v439 = vld [vmem:[%s289 + $0x2a8] sm:$0xff]
        %v440 = vld [vmem:[%s289 + $0x2b0] sm:$0xff]
        %v441 = vld [vmem:[%s289 + $0x2b8] sm:$0xff]
        %v442 = vld [vmem:[%s289 + $0x2c0] sm:$0xff]
        %v443 = vld [vmem:[%s289 + $0x2c8] sm:$0xff]
        %v444 = vld [vmem:[%s289 + $0x2d0] sm:$0xff]
        %v445 = vld [vmem:[%s289 + $0x2d8] sm:$0xff]
        %v446 = vld [vmem:[%s289 + $0x2e0] sm:$0xff]
        %v447 = vld [vmem:[%s289 + $0x2e8] sm:$0xff]
        %v448 = vld [vmem:[%s289 + $0x2f0] sm:$0xff]
        %v449 = vld [vmem:[%s289 + $0x2f8] sm:$0xff]
        %v450 = vld [vmem:[%s289 + $0x300] sm:$0xff]
        %v451 = vld [vmem:[%s289 + $0x308] sm:$0xff]
        %v452 = vld [vmem:[%s289 + $0x310] sm:$0xff]
        %v453 = vld [vmem:[%s289 + $0x318] sm:$0xff]
        %v454 = vld [vmem:[%s289 + $0x320] sm:$0xff]
        %v455 = vld [vmem:[%s289 + $0x328] sm:$0xff]
        %v456 = vld [vmem:[%s289 + $0x330] sm:$0xff]
        %v457 = vld [vmem:[%s289 + $0x338] sm:$0xff]
        %v458 = vld [vmem:[%s289 + $0x340] sm:$0xff]
        %v459 = vld [vmem:[%s289 + $0x348] sm:$0xff]
        %v460 = vld [vmem:[%s289 + $0x350] sm:$0xff]
        %v461 = vld [vmem:[%s289 + $0x358] sm:$0xff]
        %v462 = vld [vmem:[%s289 + $0x360] sm:$0xff]
        %v463 = vld [vmem:[%s289 + $0x368] sm:$0xff]
        %v464 = vld [vmem:[%s289 + $0x370] sm:$0xff]
        %v465 = vld [vmem:[%s289 + $0x378] sm:$0xff]
        %v466 = vld [vmem:[%s289 + $0x380] sm:$0xff]
        %v467 = vld [vmem:[%s289 + $0x388] sm:$0xff]
        %v468 = vld [vmem:[%s289 + $0x390] sm:$0xff]
        %v469 = vld [vmem:[%s289 + $0x398] sm:$0xff]
        %v470 = vld [vmem:[%s289 + $0x3a0] sm:$0xff]
        %v471 = vld [vmem:[%s289 + $0x3a8] sm:$0xff]
        %v472 = vld [vmem:[%s289 + $0x3b0] sm:$0xff]
        %v473 = vld [vmem:[%s289 + $0x3b8] sm:$0xff]
        %v474 = vld [vmem:[%s289 + $0x3c0] sm:$0xff]
        %v475 = vld [vmem:[%s289 + $0x3c8] sm:$0xff]
        %v476 = vld [vmem:[%s289 + $0x3d0] sm:$0xff]
        %v477 = vld [vmem:[%s289 + $0x3d8] sm:$0xff]
        %v478 = vld [vmem:[%s289 + $0x3e0] sm:$0xff]
        %v479 = vld [vmem:[%s289 + $0x3e8] sm:$0xff]
        %v480 = vld [vmem:[%s289 + $0x3f0] sm:$0xff]
        %v481 = vld [vmem:[%s289 + $0x3f8] sm:$0xff]
        %v482 = vld [vmem:[#allocation5] sm:$0xff]
        %v483 = vld [vmem:[#allocation5 + $0x8] sm:$0xff]
        %v484 = vld [vmem:[#allocation5 + $0x10] sm:$0xff]
        %v485 = vld [vmem:[#allocation5 + $0x18] sm:$0xff]
        %v486 = vld [vmem:[#allocation5 + $0x20] sm:$0xff]
        %v487 = vld [vmem:[#allocation5 + $0x28] sm:$0xff]
        %v488 = vld [vmem:[#allocation5 + $0x30] sm:$0xff]
        %v489 = vld [vmem:[#allocation5 + $0x38] sm:$0xff]
        %v490 = vld [vmem:[#allocation5 + $0x40] sm:$0xff]
        %v491 = vld [vmem:[#allocation5 + $0x48] sm:$0xff]
        %v492 = vld [vmem:[#allocation5 + $0x50] sm:$0xff]
        %v493 = vld [vmem:[#allocation5 + $0x58] sm:$0xff]
        %v494 = vld [vmem:[#allocation5 + $0x60] sm:$0xff]
        %v495 = vld [vmem:[#allocation5 + $0x68] sm:$0xff]
        %v496 = vld [vmem:[#allocation5 + $0x70] sm:$0xff]
        %v497 = vld [vmem:[#allocation5 + $0x78] sm:$0xff]
        %v498 = vld [vmem:[#allocation5 + $0x80] sm:$0xff]
        %v499 = vld [vmem:[#allocation5 + $0x88] sm:$0xff]
        %v500 = vld [vmem:[#allocation5 + $0x90] sm:$0xff]
        %v501 = vld [vmem:[#allocation5 + $0x98] sm:$0xff]
        %v502 = vld [vmem:[#allocation5 + $0xa0] sm:$0xff]
        %v503 = vld [vmem:[#allocation5 + $0xa8] sm:$0xff]
        %v504 = vld [vmem:[#allocation5 + $0xb0] sm:$0xff]
        %v505 = vld [vmem:[#allocation5 + $0xb8] sm:$0xff]
        %v506 = vld [vmem:[#allocation5 + $0xc0] sm:$0xff]
        %v507 = vld [vmem:[#allocation5 + $0xc8] sm:$0xff]
        %v508 = vld [vmem:[#allocation5 + $0xd0] sm:$0xff]
        %v509 = vld [vmem:[#allocation5 + $0xd8] sm:$0xff]
        %v510 = vld [vmem:[#allocation5 + $0xe0] sm:$0xff]
        %v511 = vld [vmem:[#allocation5 + $0xe8] sm:$0xff]
        %v512 = vld [vmem:[#allocation5 + $0xf0] sm:$0xff]
        %v513 = vld [vmem:[#allocation5 + $0xf8] sm:$0xff]
        %v514 = vld [vmem:[#allocation5 + $0x100] sm:$0xff]
        %v515 = vld [vmem:[#allocation5 + $0x108] sm:$0xff]
        %v516 = vld [vmem:[#allocation5 + $0x110] sm:$0xff]
        %v517 = vld [vmem:[#allocation5 + $0x118] sm:$0xff]
        %v518 = vld [vmem:[#allocation5 + $0x120] sm:$0xff]
        %v519 = vld [vmem:[#allocation5 + $0x128] sm:$0xff]
        %v520 = vld [vmem:[#allocation5 + $0x130] sm:$0xff]
        %v521 = vld [vmem:[#allocation5 + $0x138] sm:$0xff]
        %v522 = vld [vmem:[#allocation5 + $0x140] sm:$0xff]
        %v523 = vld [vmem:[#allocation5 + $0x148] sm:$0xff]
        %v524 = vld [vmem:[#allocation5 + $0x150] sm:$0xff]
        %v525 = vld [vmem:[#allocation5 + $0x158] sm:$0xff]
        %v526 = vld [vmem:[#allocation5 + $0x160] sm:$0xff]
        %v527 = vld [vmem:[#allocation5 + $0x168] sm:$0xff]
        %v528 = vld [vmem:[#allocation5 + $0x170] sm:$0xff]
        %v529 = vld [vmem:[#allocation5 + $0x178] sm:$0xff]
        %v530 = vld [vmem:[#allocation5 + $0x180] sm:$0xff]
        %v531 = vld [vmem:[#allocation5 + $0x188] sm:$0xff]
        %v532 = vld [vmem:[#allocation5 + $0x190] sm:$0xff]
        %v533 = vld [vmem:[#allocation5 + $0x198] sm:$0xff]
        %v534 = vld [vmem:[#allocation5 + $0x1a0] sm:$0xff]
        %v535 = vld [vmem:[#allocation5 + $0x1a8] sm:$0xff]
        %v536 = vld [vmem:[#allocation5 + $0x1b0] sm:$0xff]
        %v537 = vld [vmem:[#allocation5 + $0x1b8] sm:$0xff]
        %v538 = vld [vmem:[#allocation5 + $0x1c0] sm:$0xff]
        %v539 = vld [vmem:[#allocation5 + $0x1c8] sm:$0xff]
        %v540 = vld [vmem:[#allocation5 + $0x1d0] sm:$0xff]
        %v541 = vld [vmem:[#allocation5 + $0x1d8] sm:$0xff]
        %v542 = vld [vmem:[#allocation5 + $0x1e0] sm:$0xff]
        %v543 = vld [vmem:[#allocation5 + $0x1e8] sm:$0xff]
        %v544 = vld [vmem:[#allocation5 + $0x1f0] sm:$0xff]
        %v545 = vld [vmem:[#allocation5 + $0x1f8] sm:$0xff]
        %v546 = vld [vmem:[#allocation5 + $0x200] sm:$0xff]
        %v547 = vld [vmem:[#allocation5 + $0x208] sm:$0xff]
        %v548 = vld [vmem:[#allocation5 + $0x210] sm:$0xff]
        %v549 = vld [vmem:[#allocation5 + $0x218] sm:$0xff]
        %v550 = vld [vmem:[#allocation5 + $0x220] sm:$0xff]
        %v551 = vld [vmem:[#allocation5 + $0x228] sm:$0xff]
        %v552 = vld [vmem:[#allocation5 + $0x230] sm:$0xff]
        %v553 = vld [vmem:[#allocation5 + $0x238] sm:$0xff]
        %v554 = vld [vmem:[#allocation5 + $0x240] sm:$0xff]
        %v555 = vld [vmem:[#allocation5 + $0x248] sm:$0xff]
        %v556 = vld [vmem:[#allocation5 + $0x250] sm:$0xff]
        %v557 = vld [vmem:[#allocation5 + $0x258] sm:$0xff]
        %v558 = vld [vmem:[#allocation5 + $0x260] sm:$0xff]
        %v559 = vld [vmem:[#allocation5 + $0x268] sm:$0xff]
        %v560 = vld [vmem:[#allocation5 + $0x270] sm:$0xff]
        %v561 = vld [vmem:[#allocation5 + $0x278] sm:$0xff]
        %v562 = vld [vmem:[#allocation5 + $0x280] sm:$0xff]
        %v563 = vld [vmem:[#allocation5 + $0x288] sm:$0xff]
        %v564 = vld [vmem:[#allocation5 + $0x290] sm:$0xff]
        %v565 = vld [vmem:[#allocation5 + $0x298] sm:$0xff]
        %v566 = vld [vmem:[#allocation5 + $0x2a0] sm:$0xff]
        %v567 = vld [vmem:[#allocation5 + $0x2a8] sm:$0xff]
        %v568 = vld [vmem:[#allocation5 + $0x2b0] sm:$0xff]
        %v569 = vld [vmem:[#allocation5 + $0x2b8] sm:$0xff]
        %v570 = vld [vmem:[#allocation5 + $0x2c0] sm:$0xff]
        %v571 = vld [vmem:[#allocation5 + $0x2c8] sm:$0xff]
        %v572 = vld [vmem:[#allocation5 + $0x2d0] sm:$0xff]
        %v573 = vld [vmem:[#allocation5 + $0x2d8] sm:$0xff]
        %v574 = vld [vmem:[#allocation5 + $0x2e0] sm:$0xff]
        %v575 = vld [vmem:[#allocation5 + $0x2e8] sm:$0xff]
        %v576 = vld [vmem:[#allocation5 + $0x2f0] sm:$0xff]
        %v577 = vld [vmem:[#allocation5 + $0x2f8] sm:$0xff]
        %v578 = vld [vmem:[#allocation5 + $0x300] sm:$0xff]
        %v579 = vld [vmem:[#allocation5 + $0x308] sm:$0xff]
        %v580 = vld [vmem:[#allocation5 + $0x310] sm:$0xff]
        %v581 = vld [vmem:[#allocation5 + $0x318] sm:$0xff]
        %v582 = vld [vmem:[#allocation5 + $0x320] sm:$0xff]
        %v583 = vld [vmem:[#allocation5 + $0x328] sm:$0xff]
        %v584 = vld [vmem:[#allocation5 + $0x330] sm:$0xff]
        %v585 = vld [vmem:[#allocation5 + $0x338] sm:$0xff]
        %v586 = vld [vmem:[#allocation5 + $0x340] sm:$0xff]
        %v587 = vld [vmem:[#allocation5 + $0x348] sm:$0xff]
        %v588 = vld [vmem:[#allocation5 + $0x350] sm:$0xff]
        %v589 = vld [vmem:[#allocation5 + $0x358] sm:$0xff]
        %v590 = vld [vmem:[#allocation5 + $0x360] sm:$0xff]
        %v591 = vld [vmem:[#allocation5 + $0x368] sm:$0xff]
        %v592 = vld [vmem:[#allocation5 + $0x370] sm:$0xff]
        %v593 = vld [vmem:[#allocation5 + $0x378] sm:$0xff]
        %v594 = vld [vmem:[#allocation5 + $0x380] sm:$0xff]
        %v595 = vld [vmem:[#allocation5 + $0x388] sm:$0xff]
        %v596 = vld [vmem:[#allocation5 + $0x390] sm:$0xff]
        %v597 = vld [vmem:[#allocation5 + $0x398] sm:$0xff]
        %v598 = vld [vmem:[#allocation5 + $0x3a0] sm:$0xff]
        %v599 = vld [vmem:[#allocation5 + $0x3a8] sm:$0xff]
        %v600 = vld [vmem:[#allocation5 + $0x3b0] sm:$0xff]
        %v601 = vld [vmem:[#allocation5 + $0x3b8] sm:$0xff]
        %v602 = vld [vmem:[#allocation5 + $0x3c0] sm:$0xff]
        %v603 = vld [vmem:[#allocation5 + $0x3c8] sm:$0xff]
        %v604 = vld [vmem:[#allocation5 + $0x3d0] sm:$0xff]
        %v605 = vld [vmem:[#allocation5 + $0x3d8] sm:$0xff]
        %v606 = vld [vmem:[#allocation5 + $0x3e0] sm:$0xff]
        %v607 = vld [vmem:[#allocation5 + $0x3e8] sm:$0xff]
        %v608 = vld [vmem:[#allocation5 + $0x3f0] sm:$0xff]
        %v609 = vld [vmem:[#allocation5 + $0x3f8] sm:$0xff]
        %v610 = vld [vmem:[%s343] sm:$0xff]
        %v611 = vld [vmem:[%s343 + $0x8] sm:$0xff]
        %v612 = vld [vmem:[%s343 + $0x10] sm:$0xff]
        %v613 = vld [vmem:[%s343 + $0x18] sm:$0xff]
        %v614 = vld [vmem:[%s343 + $0x20] sm:$0xff]
        %v615 = vld [vmem:[%s343 + $0x28] sm:$0xff]
        %v616 = vld [vmem:[%s343 + $0x30] sm:$0xff]
        %v617 = vld [vmem:[%s343 + $0x38] sm:$0xff]
        %v618 = vld [vmem:[%s343 + $0x40] sm:$0xff]
        %v619 = vld [vmem:[%s343 + $0x48] sm:$0xff]
        %v620 = vld [vmem:[%s343 + $0x50] sm:$0xff]
        %v621 = vld [vmem:[%s343 + $0x58] sm:$0xff]
        %v622 = vld [vmem:[%s343 + $0x60] sm:$0xff]
        %v623 = vld [vmem:[%s343 + $0x68] sm:$0xff]
        %v624 = vld [vmem:[%s343 + $0x70] sm:$0xff]
        %v625 = vld [vmem:[%s343 + $0x78] sm:$0xff]
        %v626 = vld [vmem:[%s3] sm:$0xff]
        %v627 = vld [vmem:[%s3 + $0x8] sm:$0xff]
        %vm628 = vcmask 130048
        %v630 = vsel %vm628, %v610, 0
        %v633 = vsel %vm628, %v611, 0
        %v636 = vsel %vm628, %v612, 0
        %v639 = vsel %vm628, %v613, 0
        %v642 = vsel %vm628, %v614, 0
        %v645 = vsel %vm628, %v615, 0
        %v648 = vsel %vm628, %v616, 0
        %v651 = vsel %vm628, %v617, 0
        %v654 = vsel %vm628, %v618, 0
        %v657 = vsel %vm628, %v619, 0
        %v660 = vsel %vm628, %v620, 0
        %v663 = vsel %vm628, %v621, 0
        %v666 = vsel %vm628, %v622, 0
        %v669 = vsel %vm628, %v623, 0
        %v672 = vsel %vm628, %v624, 0
        %v675 = vsel %vm628, %v625, 0
        %677 = vmatprep.subr.mxu0 0.0
        %678 = vmatpush1.msra.mxu0 0.0
        %679 = vmatprep.subr.mxu0 0.0
        %680 = vmatpush1.msra.mxu0 0.0
        %681 = vmatprep.subr.mxu0 0.0
        %682 = vmatpush1.msra.mxu0 0.0
        %683 = vmatprep.subr.mxu0 0.0
        %684 = vmatpush1.msra.mxu0 0.0
        %685 = vmatprep.subr.mxu0 0.0
        %686 = vmatpush1.msra.mxu0 0.0
        %687 = vmatprep.subr.mxu0 0.0
        %688 = vmatpush1.msra.mxu0 0.0
        %689 = vmatprep.subr.mxu0 0.0
        %690 = vmatpush1.msra.mxu0 0.0
        %691 = vmatprep.subr.mxu0 0.0
        %692 = vmatpush1.msra.mxu0 0.0
        %693 = vmatprep.subr.mxu0 0.0
        %694 = vmatpush1.msra.mxu0 0.0
        %695 = vmatprep.subr.mxu0 0.0
        %696 = vmatpush1.msra.mxu0 0.0
        %697 = vmatprep.subr.mxu0 0.0
        %698 = vmatpush1.msra.mxu0 0.0
        %699 = vmatprep.subr.mxu0 0.0
        %700 = vmatpush1.msra.mxu0 0.0
        %701 = vmatprep.subr.mxu0 0.0
        %702 = vmatpush1.msra.mxu0 0.0
        %703 = vmatprep.subr.mxu0 0.0
        %704 = vmatpush1.msra.mxu0 0.0
        %705 = vmatprep.subr.mxu0 0.0
        %706 = vmatpush1.msra.mxu0 %v627
        %707 = vmatprep.subr.mxu0 0.0
        %708 = vmatpush1.msra.mxu0 %v626
        %709 = vmatprep.subr.mxu0 0.0
        %710 = vmatpush2.msra.mxu0 0.0
        %711 = vmatprep.subr.mxu0 0.0
        %712 = vmatpush2.msra.mxu0 0.0
        %713 = vmatprep.subr.mxu0 0.0
        %714 = vmatpush2.msra.mxu0 0.0
        %715 = vmatprep.subr.mxu0 0.0
        %716 = vmatpush2.msra.mxu0 0.0
        %717 = vmatprep.subr.mxu0 0.0
        %718 = vmatpush2.msra.mxu0 0.0
        %719 = vmatprep.subr.mxu0 0.0
        %720 = vmatpush2.msra.mxu0 0.0
        %721 = vmatprep.subr.mxu0 0.0
        %722 = vmatpush2.msra.mxu0 0.0
        %723 = vmatprep.subr.mxu0 0.0
        %724 = vmatpush2.msra.mxu0 0.0
        %725 = vmatprep.subr.mxu0 0.0
        %726 = vmatpush2.msra.mxu0 0.0
        %727 = vmatprep.subr.mxu0 0.0
        %728 = vmatpush2.msra.mxu0 0.0
        %729 = vmatprep.subr.mxu0 0.0
        %730 = vmatpush2.msra.mxu0 0.0
        %731 = vmatprep.subr.mxu0 0.0
        %732 = vmatpush2.msra.mxu0 0.0
        %733 = vmatprep.subr.mxu0 0.0
        %734 = vmatpush2.msra.mxu0 0.0
        %735 = vmatprep.subr.mxu0 0.0
        %736 = vmatpush2.msra.mxu0 0.0
        %737 = vmatprep.subr.mxu0 0.0
        %738 = vmatpush2.msra.mxu0 0.0
        %739 = vmatprep.subr.mxu0 0.0
        %740 = vmatpush2.msra.mxu0 0.0
        %741 = vmatprep.mubr.f32.mxu0 0.0
        %742 = vmatmul.mubr.f32.gmra.mxu0 %v630
        %v743 = vpop.f32.mrf.mxu0
        %v744 = vadd.f32 0.0, %v743
        %v745 = vpop.f32.mrf.mxu0
        %746 = vmatprep.mubr.f32.mxu0 0.0
        %747 = vmatmul.mubr.f32.gmra.mxu0 %v633
        %v748 = vpop.f32.mrf.mxu0
        %v749 = vadd.f32 0.0, %v748
        %v750 = vpop.f32.mrf.mxu0
        %751 = vmatprep.mubr.f32.mxu0 0.0
        %752 = vmatmul.mubr.f32.gmra.mxu0 %v636
        %v753 = vpop.f32.mrf.mxu0
        %v754 = vadd.f32 0.0, %v753
        %v755 = vpop.f32.mrf.mxu0
        %756 = vmatprep.mubr.f32.mxu0 0.0
        %757 = vmatmul.mubr.f32.gmra.mxu0 %v639
        %v758 = vpop.f32.mrf.mxu0
        %v759 = vadd.f32 0.0, %v758
        %v760 = vpop.f32.mrf.mxu0
        %761 = vmatprep.mubr.f32.mxu0 0.0
        %762 = vmatmul.mubr.f32.gmra.mxu0 %v642
        %v763 = vpop.f32.mrf.mxu0
        %v764 = vadd.f32 0.0, %v763
        %v765 = vpop.f32.mrf.mxu0
        %766 = vmatprep.mubr.f32.mxu0 0.0
        %767 = vmatmul.mubr.f32.gmra.mxu0 %v645
        %v768 = vpop.f32.mrf.mxu0
        %v769 = vadd.f32 0.0, %v768
        %v770 = vpop.f32.mrf.mxu0
        %771 = vmatprep.mubr.f32.mxu0 0.0
        %772 = vmatmul.mubr.f32.gmra.mxu0 %v648
        %v773 = vpop.f32.mrf.mxu0
        %v774 = vadd.f32 0.0, %v773
        %v775 = vpop.f32.mrf.mxu0
        %776 = vmatprep.mubr.f32.mxu0 0.0
        %777 = vmatmul.mubr.f32.gmra.mxu0 %v651
        %v778 = vpop.f32.mrf.mxu0
        %v779 = vadd.f32 0.0, %v778
        %v780 = vpop.f32.mrf.mxu0
        %781 = vmatprep.mubr.f32.mxu0 0.0
        %782 = vmatmul.mubr.f32.gmra.mxu0 %v654
        %v783 = vpop.f32.mrf.mxu0
        %v784 = vadd.f32 0.0, %v783
        %v785 = vpop.f32.mrf.mxu0
        %786 = vmatprep.mubr.f32.mxu0 0.0
        %787 = vmatmul.mubr.f32.gmra.mxu0 %v657
        %v788 = vpop.f32.mrf.mxu0
        %v789 = vadd.f32 0.0, %v788
        %v790 = vpop.f32.mrf.mxu0
        %791 = vmatprep.mubr.f32.mxu0 0.0
        %792 = vmatmul.mubr.f32.gmra.mxu0 %v660
        %v793 = vpop.f32.mrf.mxu0
        %v794 = vadd.f32 0.0, %v793
        %v795 = vpop.f32.mrf.mxu0
        %796 = vmatprep.mubr.f32.mxu0 0.0
        %797 = vmatmul.mubr.f32.gmra.mxu0 %v663
        %v798 = vpop.f32.mrf.mxu0
        %v799 = vadd.f32 0.0, %v798
        %v800 = vpop.f32.mrf.mxu0
        %801 = vmatprep.mubr.f32.mxu0 0.0
        %802 = vmatmul.mubr.f32.gmra.mxu0 %v666
        %v803 = vpop.f32.mrf.mxu0
        %v804 = vadd.f32 0.0, %v803
        %v805 = vpop.f32.mrf.mxu0
        %806 = vmatprep.mubr.f32.mxu0 0.0
        %807 = vmatmul.mubr.f32.gmra.mxu0 %v669
        %v808 = vpop.f32.mrf.mxu0
        %v809 = vadd.f32 0.0, %v808
        %v810 = vpop.f32.mrf.mxu0
        %811 = vmatprep.mubr.f32.mxu0 0.0
        %812 = vmatmul.mubr.f32.gmra.mxu0 %v672
        %v813 = vpop.f32.mrf.mxu0
        %v814 = vadd.f32 0.0, %v813
        %v815 = vpop.f32.mrf.mxu0
        %816 = vmatprep.mubr.f32.mxu0 0.0
        %817 = vmatmul.mubr.f32.gmra.mxu0 %v675
        %v818 = vpop.f32.mrf.mxu0
        %v819 = vadd.f32 0.0, %v818
        %v820 = vpop.f32.mrf.mxu0
        %821 = vdwg.mxu0
        %822 = vmatprep.subr.mxu0 0.0
        %823 = vmatpush1.msra.mxu0 %v497
        %824 = vmatprep.subr.mxu0 0.0
        %825 = vmatpush1.msra.mxu0 %v496
        %826 = vmatprep.subr.mxu0 0.0
        %827 = vmatpush1.msra.mxu0 %v495
        %828 = vmatprep.subr.mxu0 0.0
        %829 = vmatpush1.msra.mxu0 %v494
        %830 = vmatprep.subr.mxu0 0.0
        %831 = vmatpush1.msra.mxu0 %v493
        %832 = vmatprep.subr.mxu0 0.0
        %833 = vmatpush1.msra.mxu0 %v492
        %834 = vmatprep.subr.mxu0 0.0
        %835 = vmatpush1.msra.mxu0 %v491
        %836 = vmatprep.subr.mxu0 0.0
        %837 = vmatpush1.msra.mxu0 %v490
        %838 = vmatprep.subr.mxu0 0.0
        %839 = vmatpush1.msra.mxu0 %v489
        %840 = vmatprep.subr.mxu0 0.0
        %841 = vmatpush1.msra.mxu0 %v488
        %842 = vmatprep.subr.mxu0 0.0
        %843 = vmatpush1.msra.mxu0 %v487
        %844 = vmatprep.subr.mxu0 0.0
        %845 = vmatpush1.msra.mxu0 %v486
        %846 = vmatprep.subr.mxu0 0.0
        %847 = vmatpush1.msra.mxu0 %v485
        %848 = vmatprep.subr.mxu0 0.0
        %849 = vmatpush1.msra.mxu0 %v484
        %850 = vmatprep.subr.mxu0 0.0
        %851 = vmatpush1.msra.mxu0 %v483
        %852 = vmatprep.subr.mxu0 0.0
        %853 = vmatpush1.msra.mxu0 %v482
        %854 = vmatprep.subr.mxu0 0.0
        %855 = vmatpush2.msra.mxu0 %v513
        %856 = vmatprep.subr.mxu0 0.0
        %857 = vmatpush2.msra.mxu0 %v512
        %858 = vmatprep.subr.mxu0 0.0
        %859 = vmatpush2.msra.mxu0 %v511
        %860 = vmatprep.subr.mxu0 0.0
        %861 = vmatpush2.msra.mxu0 %v510
        %862 = vmatprep.subr.mxu0 0.0
        %863 = vmatpush2.msra.mxu0 %v509
        %864 = vmatprep.subr.mxu0 0.0
        %865 = vmatpush2.msra.mxu0 %v508
        %866 = vmatprep.subr.mxu0 0.0
        %867 = vmatpush2.msra.mxu0 %v507
        %868 = vmatprep.subr.mxu0 0.0
        %869 = vmatpush2.msra.mxu0 %v506
        %870 = vmatprep.subr.mxu0 0.0
        %871 = vmatpush2.msra.mxu0 %v505
        %872 = vmatprep.subr.mxu0 0.0
        %873 = vmatpush2.msra.mxu0 %v504
        %874 = vmatprep.subr.mxu0 0.0
        %875 = vmatpush2.msra.mxu0 %v503
        %876 = vmatprep.subr.mxu0 0.0
        %877 = vmatpush2.msra.mxu0 %v502
        %878 = vmatprep.subr.mxu0 0.0
        %879 = vmatpush2.msra.mxu0 %v501
        %880 = vmatprep.subr.mxu0 0.0
        %881 = vmatpush2.msra.mxu0 %v500
        %882 = vmatprep.subr.mxu0 0.0
        %883 = vmatpush2.msra.mxu0 %v499
        %884 = vmatprep.subr.mxu0 0.0
        %885 = vmatpush2.msra.mxu0 %v498
        %886 = vmatprep.mubr.f32.mxu0 %v355
        %887 = vmatmul.mubr.f32.gmra.mxu0 %v354
        %v888 = vpop.f32.mrf.mxu0
        %v889 = vadd.f32 %v744, %v888
        %v890 = vpop.f32.mrf.mxu0
        %891 = vmatprep.mubr.f32.mxu0 %v363
        %892 = vmatmul.mubr.f32.gmra.mxu0 %v362
        %v893 = vpop.f32.mrf.mxu0
        %v894 = vadd.f32 %v749, %v893
        %v895 = vpop.f32.mrf.mxu0
        %896 = vmatprep.mubr.f32.mxu0 %v371
        %897 = vmatmul.mubr.f32.gmra.mxu0 %v370
        %v898 = vpop.f32.mrf.mxu0
        %v899 = vadd.f32 %v754, %v898
        %v900 = vpop.f32.mrf.mxu0
        %901 = vmatprep.mubr.f32.mxu0 %v379
        %902 = vmatmul.mubr.f32.gmra.mxu0 %v378
        %v903 = vpop.f32.mrf.mxu0
        %v904 = vadd.f32 %v759, %v903
        %v905 = vpop.f32.mrf.mxu0
        %906 = vmatprep.mubr.f32.mxu0 %v387
        %907 = vmatmul.mubr.f32.gmra.mxu0 %v386
        %v908 = vpop.f32.mrf.mxu0
        %v909 = vadd.f32 %v764, %v908
        %v910 = vpop.f32.mrf.mxu0
        %911 = vmatprep.mubr.f32.mxu0 %v395
        %912 = vmatmul.mubr.f32.gmra.mxu0 %v394
        %v913 = vpop.f32.mrf.mxu0
        %v914 = vadd.f32 %v769, %v913
        %v915 = vpop.f32.mrf.mxu0
        %916 = vmatprep.mubr.f32.mxu0 %v403
        %917 = vmatmul.mubr.f32.gmra.mxu0 %v402
        %v918 = vpop.f32.mrf.mxu0
        %v919 = vadd.f32 %v774, %v918
        %v920 = vpop.f32.mrf.mxu0
        %921 = vmatprep.mubr.f32.mxu0 %v411
        %922 = vmatmul.mubr.f32.gmra.mxu0 %v410
        %v923 = vpop.f32.mrf.mxu0
        %v924 = vadd.f32 %v779, %v923
        %v925 = vpop.f32.mrf.mxu0
        %926 = vmatprep.mubr.f32.mxu0 %v419
        %927 = vmatmul.mubr.f32.gmra.mxu0 %v418
        %v928 = vpop.f32.mrf.mxu0
        %v929 = vadd.f32 %v784, %v928
        %v930 = vpop.f32.mrf.mxu0
        %931 = vmatprep.mubr.f32.mxu0 %v427
        %932 = vmatmul.mubr.f32.gmra.mxu0 %v426
        %v933 = vpop.f32.mrf.mxu0
        %v934 = vadd.f32 %v789, %v933
        %v935 = vpop.f32.mrf.mxu0
        %936 = vmatprep.mubr.f32.mxu0 %v435
        %937 = vmatmul.mubr.f32.gmra.mxu0 %v434
        %v938 = vpop.f32.mrf.mxu0
        %v939 = vadd.f32 %v794, %v938
        %v940 = vpop.f32.mrf.mxu0
        %941 = vmatprep.mubr.f32.mxu0 %v443
        %942 = vmatmul.mubr.f32.gmra.mxu0 %v442
        %v943 = vpop.f32.mrf.mxu0
        %v944 = vadd.f32 %v799, %v943
        %v945 = vpop.f32.mrf.mxu0
        %946 = vmatprep.mubr.f32.mxu0 %v451
        %947 = vmatmul.mubr.f32.gmra.mxu0 %v450
        %v948 = vpop.f32.mrf.mxu0
        %v949 = vadd.f32 %v804, %v948
        %v950 = vpop.f32.mrf.mxu0
        %951 = vmatprep.mubr.f32.mxu0 %v459
        %952 = vmatmul.mubr.f32.gmra.mxu0 %v458
        %v953 = vpop.f32.mrf.mxu0
        %v954 = vadd.f32 %v809, %v953
        %v955 = vpop.f32.mrf.mxu0
        %956 = vmatprep.mubr.f32.mxu0 %v467
        %957 = vmatmul.mubr.f32.gmra.mxu0 %v466
        %v958 = vpop.f32.mrf.mxu0
        %v959 = vadd.f32 %v814, %v958
        %v960 = vpop.f32.mrf.mxu0
        %961 = vmatprep.mubr.f32.mxu0 %v475
        %962 = vmatmul.mubr.f32.gmra.mxu0 %v474
        %v963 = vpop.f32.mrf.mxu0
        %v964 = vadd.f32 %v819, %v963
        %v965 = vpop.f32.mrf.mxu0
        %966 = vdwg.mxu0
        %967 = vmatprep.subr.mxu0 0.0
        %968 = vmatpush1.msra.mxu0 %v529
        %969 = vmatprep.subr.mxu0 0.0
        %970 = vmatpush1.msra.mxu0 %v528
        %971 = vmatprep.subr.mxu0 0.0
        %972 = vmatpush1.msra.mxu0 %v527
        %973 = vmatprep.subr.mxu0 0.0
        %974 = vmatpush1.msra.mxu0 %v526
        %975 = vmatprep.subr.mxu0 0.0
        %976 = vmatpush1.msra.mxu0 %v525
        %977 = vmatprep.subr.mxu0 0.0
        %978 = vmatpush1.msra.mxu0 %v524
        %979 = vmatprep.subr.mxu0 0.0
        %980 = vmatpush1.msra.mxu0 %v523
        %981 = vmatprep.subr.mxu0 0.0
        %982 = vmatpush1.msra.mxu0 %v522
        %983 = vmatprep.subr.mxu0 0.0
        %984 = vmatpush1.msra.mxu0 %v521
        %985 = vmatprep.subr.mxu0 0.0
        %986 = vmatpush1.msra.mxu0 %v520
        %987 = vmatprep.subr.mxu0 0.0
        %988 = vmatpush1.msra.mxu0 %v519
        %989 = vmatprep.subr.mxu0 0.0
        %990 = vmatpush1.msra.mxu0 %v518
        %991 = vmatprep.subr.mxu0 0.0
        %992 = vmatpush1.msra.mxu0 %v517
        %993 = vmatprep.subr.mxu0 0.0
        %994 = vmatpush1.msra.mxu0 %v516
        %995 = vmatprep.subr.mxu0 0.0
        %996 = vmatpush1.msra.mxu0 %v515
        %997 = vmatprep.subr.mxu0 0.0
        %998 = vmatpush1.msra.mxu0 %v514
        %999 = vmatprep.subr.mxu0 0.0
        %1000 = vmatpush2.msra.mxu0 %v545
        %1001 = vmatprep.subr.mxu0 0.0
        %1002 = vmatpush2.msra.mxu0 %v544
        %1003 = vmatprep.subr.mxu0 0.0
        %1004 = vmatpush2.msra.mxu0 %v543
        %1005 = vmatprep.subr.mxu0 0.0
        %1006 = vmatpush2.msra.mxu0 %v542
        %1007 = vmatprep.subr.mxu0 0.0
        %1008 = vmatpush2.msra.mxu0 %v541
        %1009 = vmatprep.subr.mxu0 0.0
        %1010 = vmatpush2.msra.mxu0 %v540
        %1011 = vmatprep.subr.mxu0 0.0
        %1012 = vmatpush2.msra.mxu0 %v539
        %1013 = vmatprep.subr.mxu0 0.0
        %1014 = vmatpush2.msra.mxu0 %v538
        %1015 = vmatprep.subr.mxu0 0.0
        %1016 = vmatpush2.msra.mxu0 %v537
        %1017 = vmatprep.subr.mxu0 0.0
        %1018 = vmatpush2.msra.mxu0 %v536
        %1019 = vmatprep.subr.mxu0 0.0
        %1020 = vmatpush2.msra.mxu0 %v535
        %1021 = vmatprep.subr.mxu0 0.0
        %1022 = vmatpush2.msra.mxu0 %v534
        %1023 = vmatprep.subr.mxu0 0.0
        %1024 = vmatpush2.msra.mxu0 %v533
        %1025 = vmatprep.subr.mxu0 0.0
        %1026 = vmatpush2.msra.mxu0 %v532
        %1027 = vmatprep.subr.mxu0 0.0
        %1028 = vmatpush2.msra.mxu0 %v531
        %1029 = vmatprep.subr.mxu0 0.0
        %1030 = vmatpush2.msra.mxu0 %v530
        %1031 = vmatprep.mubr.f32.mxu0 %v357
        %1032 = vmatmul.mubr.f32.gmra.mxu0 %v356
        %v1033 = vpop.f32.mrf.mxu0
        %v1034 = vadd.f32 %v889, %v1033
        %v1035 = vpop.f32.mrf.mxu0
        %1036 = vmatprep.mubr.f32.mxu0 %v365
        %1037 = vmatmul.mubr.f32.gmra.mxu0 %v364
        %v1038 = vpop.f32.mrf.mxu0
        %v1039 = vadd.f32 %v894, %v1038
        %v1040 = vpop.f32.mrf.mxu0
        %1041 = vmatprep.mubr.f32.mxu0 %v373
        %1042 = vmatmul.mubr.f32.gmra.mxu0 %v372
        %v1043 = vpop.f32.mrf.mxu0
        %v1044 = vadd.f32 %v899, %v1043
        %v1045 = vpop.f32.mrf.mxu0
        %1046 = vmatprep.mubr.f32.mxu0 %v381
        %1047 = vmatmul.mubr.f32.gmra.mxu0 %v380
        %v1048 = vpop.f32.mrf.mxu0
        %v1049 = vadd.f32 %v904, %v1048
        %v1050 = vpop.f32.mrf.mxu0
        %1051 = vmatprep.mubr.f32.mxu0 %v389
        %1052 = vmatmul.mubr.f32.gmra.mxu0 %v388
        %v1053 = vpop.f32.mrf.mxu0
        %v1054 = vadd.f32 %v909, %v1053
        %v1055 = vpop.f32.mrf.mxu0
        %1056 = vmatprep.mubr.f32.mxu0 %v397
        %1057 = vmatmul.mubr.f32.gmra.mxu0 %v396
        %v1058 = vpop.f32.mrf.mxu0
        %v1059 = vadd.f32 %v914, %v1058
        %v1060 = vpop.f32.mrf.mxu0
        %1061 = vmatprep.mubr.f32.mxu0 %v405
        %1062 = vmatmul.mubr.f32.gmra.mxu0 %v404
        %v1063 = vpop.f32.mrf.mxu0
        %v1064 = vadd.f32 %v919, %v1063
        %v1065 = vpop.f32.mrf.mxu0
        %1066 = vmatprep.mubr.f32.mxu0 %v413
        %1067 = vmatmul.mubr.f32.gmra.mxu0 %v412
        %v1068 = vpop.f32.mrf.mxu0
        %v1069 = vadd.f32 %v924, %v1068
        %v1070 = vpop.f32.mrf.mxu0
        %1071 = vmatprep.mubr.f32.mxu0 %v421
        %1072 = vmatmul.mubr.f32.gmra.mxu0 %v420
        %v1073 = vpop.f32.mrf.mxu0
        %v1074 = vadd.f32 %v929, %v1073
        %v1075 = vpop.f32.mrf.mxu0
        %1076 = vmatprep.mubr.f32.mxu0 %v429
        %1077 = vmatmul.mubr.f32.gmra.mxu0 %v428
        %v1078 = vpop.f32.mrf.mxu0
        %v1079 = vadd.f32 %v934, %v1078
        %v1080 = vpop.f32.mrf.mxu0
        %1081 = vmatprep.mubr.f32.mxu0 %v437
        %1082 = vmatmul.mubr.f32.gmra.mxu0 %v436
        %v1083 = vpop.f32.mrf.mxu0
        %v1084 = vadd.f32 %v939, %v1083
        %v1085 = vpop.f32.mrf.mxu0
        %1086 = vmatprep.mubr.f32.mxu0 %v445
        %1087 = vmatmul.mubr.f32.gmra.mxu0 %v444
        %v1088 = vpop.f32.mrf.mxu0
        %v1089 = vadd.f32 %v944, %v1088
        %v1090 = vpop.f32.mrf.mxu0
        %1091 = vmatprep.mubr.f32.mxu0 %v453
        %1092 = vmatmul.mubr.f32.gmra.mxu0 %v452
        %v1093 = vpop.f32.mrf.mxu0
        %v1094 = vadd.f32 %v949, %v1093
        %v1095 = vpop.f32.mrf.mxu0
        %1096 = vmatprep.mubr.f32.mxu0 %v461
        %1097 = vmatmul.mubr.f32.gmra.mxu0 %v460
        %v1098 = vpop.f32.mrf.mxu0
        %v1099 = vadd.f32 %v954, %v1098
        %v1100 = vpop.f32.mrf.mxu0
        %1101 = vmatprep.mubr.f32.mxu0 %v469
        %1102 = vmatmul.mubr.f32.gmra.mxu0 %v468
        %v1103 = vpop.f32.mrf.mxu0
        %v1104 = vadd.f32 %v959, %v1103
        %v1105 = vpop.f32.mrf.mxu0
        %1106 = vmatprep.mubr.f32.mxu0 %v477
        %1107 = vmatmul.mubr.f32.gmra.mxu0 %v476
        %v1108 = vpop.f32.mrf.mxu0
        %v1109 = vadd.f32 %v964, %v1108
        %v1110 = vpop.f32.mrf.mxu0
        %1111 = vdwg.mxu0
        %1112 = vmatprep.subr.mxu0 0.0
        %1113 = vmatpush1.msra.mxu0 %v561
        %1114 = vmatprep.subr.mxu0 0.0
        %1115 = vmatpush1.msra.mxu0 %v560
        %1116 = vmatprep.subr.mxu0 0.0
        %1117 = vmatpush1.msra.mxu0 %v559
        %1118 = vmatprep.subr.mxu0 0.0
        %1119 = vmatpush1.msra.mxu0 %v558
        %1120 = vmatprep.subr.mxu0 0.0
        %1121 = vmatpush1.msra.mxu0 %v557
        %1122 = vmatprep.subr.mxu0 0.0
        %1123 = vmatpush1.msra.mxu0 %v556
        %1124 = vmatprep.subr.mxu0 0.0
        %1125 = vmatpush1.msra.mxu0 %v555
        %1126 = vmatprep.subr.mxu0 0.0
        %1127 = vmatpush1.msra.mxu0 %v554
        %1128 = vmatprep.subr.mxu0 0.0
        %1129 = vmatpush1.msra.mxu0 %v553
        %1130 = vmatprep.subr.mxu0 0.0
        %1131 = vmatpush1.msra.mxu0 %v552
        %1132 = vmatprep.subr.mxu0 0.0
        %1133 = vmatpush1.msra.mxu0 %v551
        %1134 = vmatprep.subr.mxu0 0.0
        %1135 = vmatpush1.msra.mxu0 %v550
        %1136 = vmatprep.subr.mxu0 0.0
        %1137 = vmatpush1.msra.mxu0 %v549
        %1138 = vmatprep.subr.mxu0 0.0
        %1139 = vmatpush1.msra.mxu0 %v548
        %1140 = vmatprep.subr.mxu0 0.0
        %1141 = vmatpush1.msra.mxu0 %v547
        %1142 = vmatprep.subr.mxu0 0.0
        %1143 = vmatpush1.msra.mxu0 %v546
        %1144 = vmatprep.subr.mxu0 0.0
        %1145 = vmatpush2.msra.mxu0 %v577
        %1146 = vmatprep.subr.mxu0 0.0
        %1147 = vmatpush2.msra.mxu0 %v576
        %1148 = vmatprep.subr.mxu0 0.0
        %1149 = vmatpush2.msra.mxu0 %v575
        %1150 = vmatprep.subr.mxu0 0.0
        %1151 = vmatpush2.msra.mxu0 %v574
        %1152 = vmatprep.subr.mxu0 0.0
        %1153 = vmatpush2.msra.mxu0 %v573
        %1154 = vmatprep.subr.mxu0 0.0
        %1155 = vmatpush2.msra.mxu0 %v572
        %1156 = vmatprep.subr.mxu0 0.0
        %1157 = vmatpush2.msra.mxu0 %v571
        %1158 = vmatprep.subr.mxu0 0.0
        %1159 = vmatpush2.msra.mxu0 %v570
        %1160 = vmatprep.subr.mxu0 0.0
        %1161 = vmatpush2.msra.mxu0 %v569
        %1162 = vmatprep.subr.mxu0 0.0
        %1163 = vmatpush2.msra.mxu0 %v568
        %1164 = vmatprep.subr.mxu0 0.0
        %1165 = vmatpush2.msra.mxu0 %v567
        %1166 = vmatprep.subr.mxu0 0.0
        %1167 = vmatpush2.msra.mxu0 %v566
        %1168 = vmatprep.subr.mxu0 0.0
        %1169 = vmatpush2.msra.mxu0 %v565
        %1170 = vmatprep.subr.mxu0 0.0
        %1171 = vmatpush2.msra.mxu0 %v564
        %1172 = vmatprep.subr.mxu0 0.0
        %1173 = vmatpush2.msra.mxu0 %v563
        %1174 = vmatprep.subr.mxu0 0.0
        %1175 = vmatpush2.msra.mxu0 %v562
        %1176 = vmatprep.mubr.f32.mxu0 %v359
        %1177 = vmatmul.mubr.f32.gmra.mxu0 %v358
        %v1178 = vpop.f32.mrf.mxu0
        %v1179 = vadd.f32 %v1034, %v1178
        %v1180 = vpop.f32.mrf.mxu0
        %1181 = vmatprep.mubr.f32.mxu0 %v367
        %1182 = vmatmul.mubr.f32.gmra.mxu0 %v366
        %v1183 = vpop.f32.mrf.mxu0
        %v1184 = vadd.f32 %v1039, %v1183
        %v1185 = vpop.f32.mrf.mxu0
        %1186 = vmatprep.mubr.f32.mxu0 %v375
        %1187 = vmatmul.mubr.f32.gmra.mxu0 %v374
        %v1188 = vpop.f32.mrf.mxu0
        %v1189 = vadd.f32 %v1044, %v1188
        %v1190 = vpop.f32.mrf.mxu0
        %1191 = vmatprep.mubr.f32.mxu0 %v383
        %1192 = vmatmul.mubr.f32.gmra.mxu0 %v382
        %v1193 = vpop.f32.mrf.mxu0
        %v1194 = vadd.f32 %v1049, %v1193
        %v1195 = vpop.f32.mrf.mxu0
        %1196 = vmatprep.mubr.f32.mxu0 %v391
        %1197 = vmatmul.mubr.f32.gmra.mxu0 %v390
        %v1198 = vpop.f32.mrf.mxu0
        %v1199 = vadd.f32 %v1054, %v1198
        %v1200 = vpop.f32.mrf.mxu0
        %1201 = vmatprep.mubr.f32.mxu0 %v399
        %1202 = vmatmul.mubr.f32.gmra.mxu0 %v398
        %v1203 = vpop.f32.mrf.mxu0
        %v1204 = vadd.f32 %v1059, %v1203
        %v1205 = vpop.f32.mrf.mxu0
        %1206 = vmatprep.mubr.f32.mxu0 %v407
        %1207 = vmatmul.mubr.f32.gmra.mxu0 %v406
        %v1208 = vpop.f32.mrf.mxu0
        %v1209 = vadd.f32 %v1064, %v1208
        %v1210 = vpop.f32.mrf.mxu0
        %1211 = vmatprep.mubr.f32.mxu0 %v415
        %1212 = vmatmul.mubr.f32.gmra.mxu0 %v414
        %v1213 = vpop.f32.mrf.mxu0
        %v1214 = vadd.f32 %v1069, %v1213
        %v1215 = vpop.f32.mrf.mxu0
        %1216 = vmatprep.mubr.f32.mxu0 %v423
        %1217 = vmatmul.mubr.f32.gmra.mxu0 %v422
        %v1218 = vpop.f32.mrf.mxu0
        %v1219 = vadd.f32 %v1074, %v1218
        %v1220 = vpop.f32.mrf.mxu0
        %1221 = vmatprep.mubr.f32.mxu0 %v431
        %1222 = vmatmul.mubr.f32.gmra.mxu0 %v430
        %v1223 = vpop.f32.mrf.mxu0
        %v1224 = vadd.f32 %v1079, %v1223
        %v1225 = vpop.f32.mrf.mxu0
        %1226 = vmatprep.mubr.f32.mxu0 %v439
        %1227 = vmatmul.mubr.f32.gmra.mxu0 %v438
        %v1228 = vpop.f32.mrf.mxu0
        %v1229 = vadd.f32 %v1084, %v1228
        %v1230 = vpop.f32.mrf.mxu0
        %1231 = vmatprep.mubr.f32.mxu0 %v447
        %1232 = vmatmul.mubr.f32.gmra.mxu0 %v446
        %v1233 = vpop.f32.mrf.mxu0
        %v1234 = vadd.f32 %v1089, %v1233
        %v1235 = vpop.f32.mrf.mxu0
        %1236 = vmatprep.mubr.f32.mxu0 %v455
        %1237 = vmatmul.mubr.f32.gmra.mxu0 %v454
        %v1238 = vpop.f32.mrf.mxu0
        %v1239 = vadd.f32 %v1094, %v1238
        %v1240 = vpop.f32.mrf.mxu0
        %1241 = vmatprep.mubr.f32.mxu0 %v463
        %1242 = vmatmul.mubr.f32.gmra.mxu0 %v462
        %v1243 = vpop.f32.mrf.mxu0
        %v1244 = vadd.f32 %v1099, %v1243
        %v1245 = vpop.f32.mrf.mxu0
        %1246 = vmatprep.mubr.f32.mxu0 %v471
        %1247 = vmatmul.mubr.f32.gmra.mxu0 %v470
        %v1248 = vpop.f32.mrf.mxu0
        %v1249 = vadd.f32 %v1104, %v1248
        %v1250 = vpop.f32.mrf.mxu0
        %1251 = vmatprep.mubr.f32.mxu0 %v479
        %1252 = vmatmul.mubr.f32.gmra.mxu0 %v478
        %v1253 = vpop.f32.mrf.mxu0
        %v1254 = vadd.f32 %v1109, %v1253
        %v1255 = vpop.f32.mrf.mxu0
        %1256 = vdwg.mxu0
        %1257 = vmatprep.subr.mxu0 0.0
        %1258 = vmatpush1.msra.mxu0 %v593
        %1259 = vmatprep.subr.mxu0 0.0
        %1260 = vmatpush1.msra.mxu0 %v592
        %1261 = vmatprep.subr.mxu0 0.0
        %1262 = vmatpush1.msra.mxu0 %v591
        %1263 = vmatprep.subr.mxu0 0.0
        %1264 = vmatpush1.msra.mxu0 %v590
        %1265 = vmatprep.subr.mxu0 0.0
        %1266 = vmatpush1.msra.mxu0 %v589
        %1267 = vmatprep.subr.mxu0 0.0
        %1268 = vmatpush1.msra.mxu0 %v588
        %1269 = vmatprep.subr.mxu0 0.0
        %1270 = vmatpush1.msra.mxu0 %v587
        %1271 = vmatprep.subr.mxu0 0.0
        %1272 = vmatpush1.msra.mxu0 %v586
        %1273 = vmatprep.subr.mxu0 0.0
        %1274 = vmatpush1.msra.mxu0 %v585
        %1275 = vmatprep.subr.mxu0 0.0
        %1276 = vmatpush1.msra.mxu0 %v584
        %1277 = vmatprep.subr.mxu0 0.0
        %1278 = vmatpush1.msra.mxu0 %v583
        %1279 = vmatprep.subr.mxu0 0.0
        %1280 = vmatpush1.msra.mxu0 %v582
        %1281 = vmatprep.subr.mxu0 0.0
        %1282 = vmatpush1.msra.mxu0 %v581
        %1283 = vmatprep.subr.mxu0 0.0
        %1284 = vmatpush1.msra.mxu0 %v580
        %1285 = vmatprep.subr.mxu0 0.0
        %1286 = vmatpush1.msra.mxu0 %v579
        %1287 = vmatprep.subr.mxu0 0.0
        %1288 = vmatpush1.msra.mxu0 %v578
        %1289 = vmatprep.subr.mxu0 0.0
        %1290 = vmatpush2.msra.mxu0 %v609
        %1291 = vmatprep.subr.mxu0 0.0
        %1292 = vmatpush2.msra.mxu0 %v608
        %1293 = vmatprep.subr.mxu0 0.0
        %1294 = vmatpush2.msra.mxu0 %v607
        %1295 = vmatprep.subr.mxu0 0.0
        %1296 = vmatpush2.msra.mxu0 %v606
        %1297 = vmatprep.subr.mxu0 0.0
        %1298 = vmatpush2.msra.mxu0 %v605
        %1299 = vmatprep.subr.mxu0 0.0
        %1300 = vmatpush2.msra.mxu0 %v604
        %1301 = vmatprep.subr.mxu0 0.0
        %1302 = vmatpush2.msra.mxu0 %v603
        %1303 = vmatprep.subr.mxu0 0.0
        %1304 = vmatpush2.msra.mxu0 %v602
        %1305 = vmatprep.subr.mxu0 0.0
        %1306 = vmatpush2.msra.mxu0 %v601
        %1307 = vmatprep.subr.mxu0 0.0
        %1308 = vmatpush2.msra.mxu0 %v600
        %1309 = vmatprep.subr.mxu0 0.0
        %1310 = vmatpush2.msra.mxu0 %v599
        %1311 = vmatprep.subr.mxu0 0.0
        %1312 = vmatpush2.msra.mxu0 %v598
        %1313 = vmatprep.subr.mxu0 0.0
        %1314 = vmatpush2.msra.mxu0 %v597
        %1315 = vmatprep.subr.mxu0 0.0
        %1316 = vmatpush2.msra.mxu0 %v596
        %1317 = vmatprep.subr.mxu0 0.0
        %1318 = vmatpush2.msra.mxu0 %v595
        %1319 = vmatprep.subr.mxu0 0.0
        %1320 = vmatpush2.msra.mxu0 %v594
        %1321 = vmatprep.mubr.f32.mxu0 %v361
        %1322 = vmatmul.mubr.f32.gmra.mxu0 %v360
        %v1323 = vpop.f32.mrf.mxu0
        %v1324 = vadd.f32 %v1179, %v1323
        %v1325 = vpop.f32.mrf.mxu0
        %1326 = vmatprep.mubr.f32.mxu0 %v369
        %1327 = vmatmul.mubr.f32.gmra.mxu0 %v368
        %v1328 = vpop.f32.mrf.mxu0
        %v1329 = vadd.f32 %v1184, %v1328
        %v1330 = vpop.f32.mrf.mxu0
        %1331 = vmatprep.mubr.f32.mxu0 %v377
        %1332 = vmatmul.mubr.f32.gmra.mxu0 %v376
        %v1333 = vpop.f32.mrf.mxu0
        %v1334 = vadd.f32 %v1189, %v1333
        %v1335 = vpop.f32.mrf.mxu0
        %1336 = vmatprep.mubr.f32.mxu0 %v385
        %1337 = vmatmul.mubr.f32.gmra.mxu0 %v384
        %v1338 = vpop.f32.mrf.mxu0
        %v1339 = vadd.f32 %v1194, %v1338
        %v1340 = vpop.f32.mrf.mxu0
        %1341 = vmatprep.mubr.f32.mxu0 %v393
        %1342 = vmatmul.mubr.f32.gmra.mxu0 %v392
        %v1343 = vpop.f32.mrf.mxu0
        %v1344 = vadd.f32 %v1199, %v1343
        %v1345 = vpop.f32.mrf.mxu0
        %1346 = vmatprep.mubr.f32.mxu0 %v401
        %1347 = vmatmul.mubr.f32.gmra.mxu0 %v400
        %v1348 = vpop.f32.mrf.mxu0
        %v1349 = vadd.f32 %v1204, %v1348
        %v1350 = vpop.f32.mrf.mxu0
        %1351 = vmatprep.mubr.f32.mxu0 %v409
        %1352 = vmatmul.mubr.f32.gmra.mxu0 %v408
        %v1353 = vpop.f32.mrf.mxu0
        %v1354 = vadd.f32 %v1209, %v1353
        %v1355 = vpop.f32.mrf.mxu0
        %1356 = vmatprep.mubr.f32.mxu0 %v417
        %1357 = vmatmul.mubr.f32.gmra.mxu0 %v416
        %v1358 = vpop.f32.mrf.mxu0
        %v1359 = vadd.f32 %v1214, %v1358
        %v1360 = vpop.f32.mrf.mxu0
        %1361 = vmatprep.mubr.f32.mxu0 %v425
        %1362 = vmatmul.mubr.f32.gmra.mxu0 %v424
        %v1363 = vpop.f32.mrf.mxu0
        %v1364 = vadd.f32 %v1219, %v1363
        %v1365 = vpop.f32.mrf.mxu0
        %1366 = vmatprep.mubr.f32.mxu0 %v433
        %1367 = vmatmul.mubr.f32.gmra.mxu0 %v432
        %v1368 = vpop.f32.mrf.mxu0
        %v1369 = vadd.f32 %v1224, %v1368
        %v1370 = vpop.f32.mrf.mxu0
        %1371 = vmatprep.mubr.f32.mxu0 %v441
        %1372 = vmatmul.mubr.f32.gmra.mxu0 %v440
        %v1373 = vpop.f32.mrf.mxu0
        %v1374 = vadd.f32 %v1229, %v1373
        %v1375 = vpop.f32.mrf.mxu0
        %1376 = vmatprep.mubr.f32.mxu0 %v449
        %1377 = vmatmul.mubr.f32.gmra.mxu0 %v448
        %v1378 = vpop.f32.mrf.mxu0
        %v1379 = vadd.f32 %v1234, %v1378
        %v1380 = vpop.f32.mrf.mxu0
        %1381 = vmatprep.mubr.f32.mxu0 %v457
        %1382 = vmatmul.mubr.f32.gmra.mxu0 %v456
        %v1383 = vpop.f32.mrf.mxu0
        %v1384 = vadd.f32 %v1239, %v1383
        %v1385 = vpop.f32.mrf.mxu0
        %1386 = vmatprep.mubr.f32.mxu0 %v465
        %1387 = vmatmul.mubr.f32.gmra.mxu0 %v464
        %v1388 = vpop.f32.mrf.mxu0
        %v1389 = vadd.f32 %v1244, %v1388
        %v1390 = vpop.f32.mrf.mxu0
        %1391 = vmatprep.mubr.f32.mxu0 %v473
        %1392 = vmatmul.mubr.f32.gmra.mxu0 %v472
        %v1393 = vpop.f32.mrf.mxu0
        %v1394 = vadd.f32 %v1249, %v1393
        %v1395 = vpop.f32.mrf.mxu0
        %1396 = vmatprep.mubr.f32.mxu0 %v481
        %1397 = vmatmul.mubr.f32.gmra.mxu0 %v480
        %v1398 = vpop.f32.mrf.mxu0
        %v1399 = vadd.f32 %v1254, %v1398
        %v1400 = vpop.f32.mrf.mxu0
        %1401 = vdwg.mxu0
        %v1402 = vld [vmem:[%s350] sm:$0x1]
        %v1404 = vlaneseq
        %v1405 = vshrl.u32 %v1404, 7
        %v1406 = vsub.s32 0, %v1405
        %v1407 = vrot.slane %v1402, %v1406
        %v1409 = vadd.f32 %v1324, %v1407
        %v1410 = vadd.f32 %v1329, %v1407
        %v1411 = vadd.f32 %v1334, %v1407
        %v1412 = vadd.f32 %v1339, %v1407
        %v1413 = vadd.f32 %v1344, %v1407
        %v1414 = vadd.f32 %v1349, %v1407
        %v1415 = vadd.f32 %v1354, %v1407
        %v1416 = vadd.f32 %v1359, %v1407
        %v1417 = vadd.f32 %v1364, %v1407
        %v1418 = vadd.f32 %v1369, %v1407
        %v1419 = vadd.f32 %v1374, %v1407
        %v1420 = vadd.f32 %v1379, %v1407
        %v1421 = vadd.f32 %v1384, %v1407
        %v1422 = vadd.f32 %v1389, %v1407
        %v1423 = vadd.f32 %v1394, %v1407
        %v1424 = vadd.f32 %v1399, %v1407
        %1425 = vst [vmem:[%s334] sm:$0xff] %v1409
        %1426 = vst [vmem:[%s334 + $0x8] sm:$0xff] %v1410
        %1427 = vst [vmem:[%s334 + $0x10] sm:$0xff] %v1411
        %1428 = vst [vmem:[%s334 + $0x18] sm:$0xff] %v1412
        %1429 = vst [vmem:[%s334 + $0x20] sm:$0xff] %v1413
        %1430 = vst [vmem:[%s334 + $0x28] sm:$0xff] %v1414
        %1431 = vst [vmem:[%s334 + $0x30] sm:$0xff] %v1415
        %1432 = vst [vmem:[%s334 + $0x38] sm:$0xff] %v1416
        %1433 = vst [vmem:[%s334 + $0x40] sm:$0xff] %v1417
        %1434 = vst [vmem:[%s334 + $0x48] sm:$0xff] %v1418
        %1435 = vst [vmem:[%s334 + $0x50] sm:$0xff] %v1419
        %1436 = vst [vmem:[%s334 + $0x58] sm:$0xff] %v1420
        %1437 = vst [vmem:[%s334 + $0x60] sm:$0xff] %v1421
        %1438 = vst [vmem:[%s334 + $0x68] sm:$0xff] %v1422
        %1439 = vst [vmem:[%s334 + $0x70] sm:$0xff] %v1423
        %1440 = vst [vmem:[%s334 + $0x78] sm:$0xff] %v1424
        %s1441 = sand.u32 %s182, 1
        %s1442 = scalar_lea.sflag [#allocation4], %s1441
        %s1443 = sand.u32 %s182, 1
        %s1444 = smul.addr %s1443, 128
        %s1445 = scalar_lea.vmem [#allocation7], %s1444
        // Predicated region
        $region49: #{tpu_custom_call.1} parent=39 // pred_check
          %p1446 = pneg %p192
        $region50: #{tpu_custom_call.1} parent=39 // pred_check_branch
          %1448 = sbr.rel (%p1446) target = $region52
        $region51: #{tpu_custom_call.1} parent=39 // pred_region
          %s1449 = smul.u32 16, %s29
          %s1451 = ssub.s32 2048, 2048
          %1452 = vsyncadd %s1442, %s1451
          %s1453 = sadd.s32 %s30, %s1449
          %s1454 = smul.addr %s28, 16
          %s1455 = sadd.s32 %s1453, %s1454
          %s1456 = smul.addr %s1455, 128
          %s1457 = scalar_lea.hbm %s5, %s1456
          %s1458 = sshll.u32 %s1445, 4
          %s1459 = int_to_ptr.vmem [resolvable:$true] %s1458
          %1464 = dma.vmem_to_hbm [thread:$0]  %s1459, 2048, %s1457, %s1442, 128, 128, 8
        $region52: #{tpu_custom_call.1} parent=39 // pred_fallthru
          _
      $region40: #{tpu_custom_call.1} parent=5 // pred_fallthru
        _
      %p1465 = scmp.le.s32.totalorder 2, %s18
      // Predicated region
      $region53: #{tpu_custom_call.1} parent=5 // pred_check
        %p1466 = pneg %p1465
      $region54: #{tpu_custom_call.1} parent=5 // pred_check_branch
        %1468 = sbr.rel (%p1466) target = $region56
      $region55: #{tpu_custom_call.1} parent=5 // pred_region
        %s1469 = ssub.s32 %s18, 2
        // Predicated region
        $region57: #{tpu_custom_call.1} parent=55 // pred_check
          %p1470 = pneg %p198
        $region58: #{tpu_custom_call.1} parent=55 // pred_check_branch
          %1472 = sbr.rel (%p1470) target = $region60
        $region59: #{tpu_custom_call.1} parent=55 // pred_region
          %s1473 = sand.u32 %s183, 1
          %s1474 = scalar_lea.sflag [#allocation4], %s1473
          %s1475 = sand.u32 %s183, 1
          %s1476 = smul.addr %s1475, 128
          %s1477 = scalar_lea.vmem [#allocation7], %s1476
          %1478 = dma.done %s1474, 2048
        $region60: #{tpu_custom_call.1} parent=55 // pred_fallthru
          _
      $region56: #{tpu_custom_call.1} parent=5 // pred_fallthru
        _
    $region6: #{tpu_custom_call.1} parent=1 // loop_footer
      %s22 = sadd.s32 1, %s18
    $region7: #{tpu_custom_call.1} parent=1 // loop_footer_branch
      %17 = sbr.rel target = $region3
    $region8: #{tpu_custom_call.1} parent=1 // loop_exit
      _
    %1479 = vsyncpa [#allocation3], 1
    %s1480 = scalar_lea.sflag [#allocation3], 1
    %1481 = vsyncpa %s1480, 1
    %1482 = vsyncpa [#allocation6], 1
    %1483 = vsyncpa [#allocation4], 1
    %s1484 = scalar_lea.sflag [#allocation4], 1
    %1485 = vsyncpa %s1484, 1

</llo_original>
